<compile_context>
chip_gen: v7x
topology: tpu7x:2x2x1
jax: 0.10.0
libtpu: 0.0.40
codegen_flags: <defaults>
</compile_context>

<pallas_src>
import functools

import numpy as np
import jax
import jax.numpy as jnp
from jax import lax
from jax.experimental import pallas as pl
from jax.experimental.pallas import tpu as pltpu


# ----------------------------------------------------------------------------
# Fused kernel.  One grid step handles one N1-block (nb columns) of the output.
#   x3  : (B*C3, N3) bf16      wd   : (B*C1, B*C3) bf16   kron(I_B, w21@w32)
#   x2  : (B*C2, N2) bf16      w21d : (B*C1, B*C2) bf16   kron(I_B, w21)
#   x1  : (B*C1, nb) f32       r31  : (N3, nb)     bf16   composed 4x resize
#   beff: (B*C1, 1)  f32       r21  : (N2, nb)     bf16   2x resize
#   o   : (B*C1, nb) f32
# ----------------------------------------------------------------------------
def fusion_kernel(x3_ref, x2_ref, x1_ref, wd_ref, w21d_ref, r31_ref, r21_ref,
                  beff_ref, o_ref):
    # Channel mixing at low / mid resolution (batch stacked along sublanes).
    a = jnp.dot(wd_ref[...], x3_ref[...],
                preferred_element_type=jnp.float32)        # (B*C1, N3)
    b = jnp.dot(w21d_ref[...], x2_ref[...],
                preferred_element_type=jnp.float32)        # (B*C1, N2)
    # Flattened bilinear upsamples as lane-dense matmuls.
    ua = jnp.dot(a.astype(jnp.bfloat16), r31_ref[...],
                 preferred_element_type=jnp.float32)       # (B*C1, nb)
    ub = jnp.dot(b.astype(jnp.bfloat16), r21_ref[...],
                 preferred_element_type=jnp.float32)       # (B*C1, nb)
    o_ref[...] = ua + ub + beff_ref[...] + x1_ref[...]


def run_fusion(x3s, x2s, x1s, wd, w21d, r31, r21, beff, num_blocks):
    BC3, N3 = x3s.shape
    BC2, N2 = x2s.shape
    BC1, N1 = x1s.shape
    assert N1 % num_blocks == 0
    nb = N1 // num_blocks

    def const_spec(shape):
        # Constant index_map -> block DMA'd once and reused across grid steps.
        return pl.BlockSpec(shape, lambda j: (0,) * len(shape))

    ins = (x3s, x2s, x1s, wd, w21d, r31, r21, beff)
    flops = 2 * (num_blocks * (BC1 * BC3 * N3 + BC1 * BC2 * N2)
                 + BC1 * N3 * N1 + BC1 * N2 * N1)
    bytes_accessed = int(sum(a.size * a.dtype.itemsize for a in ins)
                         + BC1 * N1 * 4)

    return pl.pallas_call(
        fusion_kernel,
        out_shape=jax.ShapeDtypeStruct((BC1, N1), jnp.float32),
        grid=(num_blocks,),
        in_specs=[
            const_spec((BC3, N3)),                        # layer3 (full)
            const_spec((BC2, N2)),                        # layer2 (full)
            pl.BlockSpec((BC1, nb), lambda j: (0, j)),    # layer1 residual block
            const_spec((BC1, BC3)),                       # kron(I_B, w21@w32)
            const_spec((BC1, BC2)),                       # kron(I_B, w21)
            pl.BlockSpec((N3, nb), lambda j: (0, j)),     # composed 4x resize
            pl.BlockSpec((N2, nb), lambda j: (0, j)),     # 2x resize
            const_spec((BC1, 1)),                         # fused bias
        ],
        out_specs=pl.BlockSpec((BC1, nb), lambda j: (0, j)),
        compiler_params=pltpu.CompilerParams(
            dimension_semantics=("parallel",)),           # 2 blocks -> 2 TCs on v7x
        cost_estimate=pl.CostEstimate(flops=int(flops), transcendentals=0,
                                      bytes_accessed=bytes_accessed),
    )(*ins)


# ----------------------------------------------------------------------------
# Host-side (numpy, cached) constant construction.
# ----------------------------------------------------------------------------
def _bilinear_matrix_np(in_size, out_size):
    # PyTorch nn.Upsample(mode='bilinear', align_corners=True): src = dst*(in-1)/(out-1)
    dst = np.arange(out_size, dtype=np.float64)
    if out_size > 1:
        src = dst * (float(in_size - 1) / float(out_size - 1))
    else:
        src = np.zeros_like(dst)
    i0 = np.clip(np.floor(src).astype(np.int64), 0, in_size - 1)
    i1 = np.minimum(i0 + 1, in_size - 1)
    w1 = src - i0
    w0 = 1.0 - w1
    m = np.zeros((out_size, in_size), dtype=np.float64)
    rows = np.arange(out_size)
    np.add.at(m, (rows, i0), w0)
    np.add.at(m, (rows, i1), w1)
    return m  # (out_size, in_size)


@functools.lru_cache(maxsize=None)
def _resize_mats_np(h3, w3, h2, w2, h1, w1):
    r2a_t = np.kron(_bilinear_matrix_np(h3, h2), _bilinear_matrix_np(w3, w2)).T  # (N3, N2)
    r21_t = np.kron(_bilinear_matrix_np(h2, h1), _bilinear_matrix_np(w2, w1)).T  # (N2, N1)
    r31_t = r2a_t @ r21_t                                                        # (N3, N1)
    return r31_t, r21_t


def make_fusion_params(w32, b32, w21, b21, batch, shape3, shape2, shape1,
                       act_dtype=jnp.bfloat16):
    """Build all kernel constants once (numpy on host, then moved to device).

    w32/b32: Conv2d(C3->C2, 1) weight (C2, C3) / bias (C2,)
    w21/b21: Conv2d(C2->C1, 1) weight (C1, C2) / bias (C1,)
    shape{3,2,1}: (H, W) of layer3 / layer2 / layer1
    """
    (h3, w3_), (h2, w2_), (h1, w1_) = shape3, shape2, shape1
    # TODO(synk): for large feature maps (H1*W1 >~ 4096) the dense kron resize
    # matrix grows quartically and would blow v7x's VMEM budget; switch to a
    # separable (W-axis matmul then H-axis matmul) upsample or tile N1 first.
    r31_np, r21_np = _resize_mats_np(h3, w3_, h2, w2_, h1, w1_)

    w32n = np.asarray(w32, dtype=np.float64)
    b32n = np.asarray(b32, dtype=np.float64)
    w21n = np.asarray(w21, dtype=np.float64)
    b21n = np.asarray(b21, dtype=np.float64)

    eye = np.eye(batch, dtype=np.float64)
    wd = np.kron(eye, w21n @ w32n)                                   # (B*C1, B*C3)
    w21d = np.kron(eye, w21n)                                        # (B*C1, B*C2)
    beff = np.tile((w21n @ b32n + b21n).reshape(-1, 1), (batch, 1))  # (B*C1, 1)

    return dict(
        wd=jnp.asarray(wd, act_dtype),
        w21d=jnp.asarray(w21d, act_dtype),
        r31=jnp.asarray(r31_np, act_dtype),
        r21=jnp.asarray(r21_np, act_dtype),
        beff=jnp.asarray(beff, jnp.float32),
        act_dtype=act_dtype,
    )


def _num_parallel_blocks(n1):
    # Two-way lane split only on chips with 2 TensorCores per device (v7x and
    # megacore v4/v5p); on single-TC v5e/v6e extra grid steps are pure overhead.
    if n1 % 256 != 0:
        return 1
    try:
        kind = jax.devices()[0].device_kind.lower()
    except Exception:
        return 1
    if any(t in kind for t in ("v7", "7x", "v5p", "v4")):
        return 2
    return 1


# ----------------------------------------------------------------------------
# Forward wrapper: per-call work is only contiguous reshapes + dtype cast +
# one pallas_call (all constants come from make_fusion_params).
# ----------------------------------------------------------------------------
def multi_scale_fusion_forward(layer1_x, layer2_x, layer3_x, params,
                               num_blocks=None):
    B, C1, H1, W1 = layer1_x.shape
    _, C2, H2, W2 = layer2_x.shape
    _, C3, H3, W3 = layer3_x.shape
    N1, N2, N3 = H1 * W1, H2 * W2, H3 * W3
    if num_blocks is None:
        num_blocks = _num_parallel_blocks(N1)

    act_dtype = params["act_dtype"]
    # Contiguous reshapes only (no transpose): batch folds into the sublane axis.
    x3s = layer3_x.reshape(B * C3, N3).astype(act_dtype)
    x2s = layer2_x.reshape(B * C2, N2).astype(act_dtype)
    x1s = layer1_x.reshape(B * C1, N1)                      # residual stays f32

    outf = run_fusion(x3s, x2s, x1s, params["wd"], params["w21d"],
                      params["r31"], params["r21"], params["beff"], num_blocks)
    return outf.reshape(B, C1, H1, W1)


# ----------------------------------------------------------------------------
# Pure-JAX reference following the PyTorch op order literally
# (upsample -> conv -> residual add), f32 HIGHEST precision.
# ----------------------------------------------------------------------------
def _upsample2x_ref(x, ry, rx):
    hp = lax.Precision.HIGHEST
    t = jnp.einsum('xw,bchw->bchx', rx, x, precision=hp)
    return jnp.einsum('yh,bchx->bcyx', ry, t, precision=hp)


def ref_forward(layer1_x, layer2_x, layer3_x, w32, b32, w21, b21):
    hp = lax.Precision.HIGHEST
    _, _, H3, W3 = layer3_x.shape
    _, _, H2, W2 = layer2_x.shape
    _, _, H1, W1 = layer1_x.shape
    ry3 = jnp.asarray(_bilinear_matrix_np(H3, H2), jnp.float32)
    rx3 = jnp.asarray(_bilinear_matrix_np(W3, W2), jnp.float32)
    ry2 = jnp.asarray(_bilinear_matrix_np(H2, H1), jnp.float32)
    rx2 = jnp.asarray(_bilinear_matrix_np(W2, W1), jnp.float32)

    u3 = _upsample2x_ref(layer3_x, ry3, rx3)
    t2 = jnp.einsum('oc,bcyx->boyx', w32, u3, precision=hp) + b32[None, :, None, None]
    s2 = layer2_x + t2
    u2 = _upsample2x_ref(s2, ry2, rx2)
    t1 = jnp.einsum('oc,bcyx->boyx', w21, u2, precision=hp) + b21[None, :, None, None]
    return layer1_x + t1


if __name__ == "__main__":
    key = jax.random.PRNGKey(0)
    k1, k2, k3, kw32, kb32, kw21, kb21 = jax.random.split(key, 7)

    B = 2
    C1, C2, C3 = 32, 192, 256          # channels=(32, 192, 256)
    H3 = W3 = 8
    H2, W2 = 2 * H3, 2 * W3            # 16, 16
    H1, W1 = 2 * H2, 2 * W2            # 32, 32

    layer1_x = jax.random.normal(k1, (B, C1, H1, W1), jnp.float32)
    layer2_x = jax.random.normal(k2, (B, C2, H2, W2), jnp.float32)
    layer3_x = jax.random.normal(k3, (B, C3, H3, W3), jnp.float32)

    # Conv2d(256,192,1) / Conv2d(192,32,1) parameters (1x1 kernel dims squeezed).
    w32 = jax.random.normal(kw32, (C2, C3), jnp.float32) * 0.05
    b32 = jax.random.normal(kb32, (C2,), jnp.float32) * 0.05
    w21 = jax.random.normal(kw21, (C1, C2), jnp.float32) * 0.05
    b21 = jax.random.normal(kb21, (C1,), jnp.float32) * 0.05

    # Constants built once (would be done at module init in a real model).
    params = make_fusion_params(w32, b32, w21, b21, batch=B,
                                shape3=(H3, W3), shape2=(H2, W2), shape1=(H1, W1))

    out = multi_scale_fusion_forward(layer1_x, layer2_x, layer3_x, params)
    out = jax.block_until_ready(out)

    assert out.shape == (B, C1, H1, W1), out.shape
    assert bool(jnp.all(jnp.isfinite(out)))

    ref = ref_forward(layer1_x, layer2_x, layer3_x, w32, b32, w21, b21)
    ref = jax.block_until_ready(ref)
    # bf16 operands (f32 accumulation) + algebraic refactoring => bf16-level
    # differences vs the literal f32 op order; loose tolerance is expected.
    assert bool(jnp.allclose(out, ref, rtol=2e-2, atol=2e-2))

    print("KERNEL_OK")
</pallas_src>

<mosaic_0001>
module attributes {stable_mosaic.version = 11 : i64} {
  func.func @fusion_kernel(%arg0: i32, %arg1: memref<512x64xbf16, #tpu.memory_space<vmem>>, %arg2: memref<384x256xbf16, #tpu.memory_space<vmem>>, %arg3: memref<64x1024xf32, #tpu.memory_space<vmem>>, %arg4: memref<64x512xbf16, #tpu.memory_space<vmem>>, %arg5: memref<64x384xbf16, #tpu.memory_space<vmem>>, %arg6: memref<64x1024xbf16, #tpu.memory_space<vmem>>, %arg7: memref<256x1024xbf16, #tpu.memory_space<vmem>>, %arg8: memref<64x1xf32, #tpu.memory_space<vmem>>, %arg9: memref<64x1024xf32, #tpu.memory_space<vmem>>) attributes {dimension_semantics = [#tpu.dimension_semantics<parallel>], iteration_bounds = array<i64: 1>, scalar_prefetch = 0 : i64, scratch_operands = 0 : i64, tpu.core_type = #tpu.core_type<tc>, window_params = [{pipeline_mode = #tpu.pipeline_mode<synchronous>, transform_indices = @transform_0, window_bounds = array<i64: 512, 64>}, {pipeline_mode = #tpu.pipeline_mode<synchronous>, transform_indices = @transform_1, window_bounds = array<i64: 384, 256>}, {transform_indices = @transform_2, window_bounds = array<i64: 64, 1024>}, {pipeline_mode = #tpu.pipeline_mode<synchronous>, transform_indices = @transform_3, window_bounds = array<i64: 64, 512>}, {pipeline_mode = #tpu.pipeline_mode<synchronous>, transform_indices = @transform_4, window_bounds = array<i64: 64, 384>}, {transform_indices = @transform_5, window_bounds = array<i64: 64, 1024>}, {transform_indices = @transform_6, window_bounds = array<i64: 256, 1024>}, {pipeline_mode = #tpu.pipeline_mode<synchronous>, transform_indices = @transform_7, window_bounds = array<i64: 64, 1>}, {transform_indices = @transform_8, window_bounds = array<i64: 64, 1024>}]} {
    %c0 = arith.constant 0 : index
    %c0_0 = arith.constant 0 : index
    %0 = vector.load %arg4[%c0, %c0_0] : memref<64x512xbf16, #tpu.memory_space<vmem>>, vector<64x512xbf16>
    %c0_1 = arith.constant 0 : index
    %c0_2 = arith.constant 0 : index
    %1 = vector.load %arg1[%c0_1, %c0_2] : memref<512x64xbf16, #tpu.memory_space<vmem>>, vector<512x64xbf16>
    %cst = arith.constant dense<0.000000e+00> : vector<64x64xf32>
    %2 = tpu.matmul %0, %1, %cst {dimension_numbers = #tpu.dot_dimension_numbers<[1], [0], [0], [1], [0, 0, 1, 1], [], []>} : vector<64x512xbf16>, vector<512x64xbf16>, vector<64x64xf32> -> vector<64x64xf32>
    %c0_3 = arith.constant 0 : index
    %c0_4 = arith.constant 0 : index
    %3 = vector.load %arg5[%c0_3, %c0_4] : memref<64x384xbf16, #tpu.memory_space<vmem>>, vector<64x384xbf16>
    %c0_5 = arith.constant 0 : index
    %c0_6 = arith.constant 0 : index
    %4 = vector.load %arg2[%c0_5, %c0_6] : memref<384x256xbf16, #tpu.memory_space<vmem>>, vector<384x256xbf16>
    %cst_7 = arith.constant dense<0.000000e+00> : vector<64x256xf32>
    %5 = tpu.matmul %3, %4, %cst_7 {dimension_numbers = #tpu.dot_dimension_numbers<[1], [0], [0], [1], [0, 0, 1, 1], [], []>} : vector<64x384xbf16>, vector<384x256xbf16>, vector<64x256xf32> -> vector<64x256xf32>
    %6 = arith.truncf %2 : vector<64x64xf32> to vector<64x64xbf16>
    %c0_8 = arith.constant 0 : index
    %c0_9 = arith.constant 0 : index
    %7 = vector.load %arg6[%c0_8, %c0_9] : memref<64x1024xbf16, #tpu.memory_space<vmem>>, vector<64x1024xbf16>
    %cst_10 = arith.constant dense<0.000000e+00> : vector<64x1024xf32>
    %8 = tpu.matmul %6, %7, %cst_10 {dimension_numbers = #tpu.dot_dimension_numbers<[1], [0], [0], [1], [0, 0, 1, 1], [], []>} : vector<64x64xbf16>, vector<64x1024xbf16>, vector<64x1024xf32> -> vector<64x1024xf32>
    %9 = arith.truncf %5 : vector<64x256xf32> to vector<64x256xbf16>
    %c0_11 = arith.constant 0 : index
    %c0_12 = arith.constant 0 : index
    %10 = vector.load %arg7[%c0_11, %c0_12] : memref<256x1024xbf16, #tpu.memory_space<vmem>>, vector<256x1024xbf16>
    %cst_13 = arith.constant dense<0.000000e+00> : vector<64x1024xf32>
    %11 = tpu.matmul %9, %10, %cst_13 {dimension_numbers = #tpu.dot_dimension_numbers<[1], [0], [0], [1], [0, 0, 1, 1], [], []>} : vector<64x256xbf16>, vector<256x1024xbf16>, vector<64x1024xf32> -> vector<64x1024xf32>
    %12 = arith.addf %8, %11 : vector<64x1024xf32>
    %c0_14 = arith.constant 0 : index
    %c0_15 = arith.constant 0 : index
    %13 = vector.load %arg8[%c0_14, %c0_15] : memref<64x1xf32, #tpu.memory_space<vmem>>, vector<64x1xf32>
    %14 = vector.broadcast %13 : vector<64x1xf32> to vector<64x1024xf32>
    %15 = arith.addf %12, %14 : vector<64x1024xf32>
    %c0_16 = arith.constant 0 : index
    %c0_17 = arith.constant 0 : index
    %16 = vector.load %arg3[%c0_16, %c0_17] : memref<64x1024xf32, #tpu.memory_space<vmem>>, vector<64x1024xf32>
    %17 = arith.addf %15, %16 : vector<64x1024xf32>
    %c0_18 = arith.constant 0 : index
    %c0_19 = arith.constant 0 : index
    %18 = vector.load %arg9[%c0_18, %c0_19] : memref<64x1024xf32, #tpu.memory_space<vmem>>, vector<64x1024xf32>
    tpu.vector_store %arg9[%c0_18, %c0_19], %17 {strides = array<i32>} : memref<64x1024xf32, #tpu.memory_space<vmem>>, vector<64x1024xf32>,
    return
  }
  func.func @transform_0(%arg0: i32) -> (i32, i32) {
    %c0_i32 = arith.constant 0 : i32
    %c0_i32_0 = arith.constant 0 : i32
    %c0_i32_1 = arith.constant 0 : i32
    return %c0_i32, %c0_i32_0 : i32, i32
  }
  func.func @transform_1(%arg0: i32) -> (i32, i32) {
    %c0_i32 = arith.constant 0 : i32
    %c0_i32_0 = arith.constant 0 : i32
    %c0_i32_1 = arith.constant 0 : i32
    return %c0_i32, %c0_i32_0 : i32, i32
  }
  func.func @transform_2(%arg0: i32) -> (i32, i32) {
    %c0_i32 = arith.constant 0 : i32
    %c0_i32_0 = arith.constant 0 : i32
    return %c0_i32, %arg0 : i32, i32
  }
  func.func @transform_3(%arg0: i32) -> (i32, i32) {
    %c0_i32 = arith.constant 0 : i32
    %c0_i32_0 = arith.constant 0 : i32
    %c0_i32_1 = arith.constant 0 : i32
    return %c0_i32, %c0_i32_0 : i32, i32
  }
  func.func @transform_4(%arg0: i32) -> (i32, i32) {
    %c0_i32 = arith.constant 0 : i32
    %c0_i32_0 = arith.constant 0 : i32
    %c0_i32_1 = arith.constant 0 : i32
    return %c0_i32, %c0_i32_0 : i32, i32
  }
  func.func @transform_5(%arg0: i32) -> (i32, i32) {
    %c0_i32 = arith.constant 0 : i32
    %c0_i32_0 = arith.constant 0 : i32
    return %c0_i32, %arg0 : i32, i32
  }
  func.func @transform_6(%arg0: i32) -> (i32, i32) {
    %c0_i32 = arith.constant 0 : i32
    %c0_i32_0 = arith.constant 0 : i32
    return %c0_i32, %arg0 : i32, i32
  }
  func.func @transform_7(%arg0: i32) -> (i32, i32) {
    %c0_i32 = arith.constant 0 : i32
    %c0_i32_0 = arith.constant 0 : i32
    %c0_i32_1 = arith.constant 0 : i32
    return %c0_i32, %c0_i32_0 : i32, i32
  }
  func.func @transform_8(%arg0: i32) -> (i32, i32) {
    %c0_i32 = arith.constant 0 : i32
    %c0_i32_0 = arith.constant 0 : i32
    return %c0_i32, %arg0 : i32, i32
  }
}

</mosaic_0001>

<llo_original>
// kernel: tpu_custom_call.1
$region0: #{tpu_custom_call.1}
  #allocation0 [shape = 'u32[]', space=smem, size = 0x4, offset = 0x4, fixed_abs, tag = 'smem constant byte address 0x4 - core index']
  #allocation1 [shape = 'u32[144,128]{1,0:T(1,128)}', space=vmem, size = 0x12000, scoped, tag = 'internal scratch']
  %s0 = inlined_call_operand.vmem [shape: bf16[512,64], index: 0, kind: input, shape index: {}]
  %s1 = inlined_call_operand.vmem [shape: bf16[384,256], index: 1, kind: input, shape index: {}]
  %s2 = inlined_call_operand.hbm [shape: f32[64,1024], index: 2, kind: input, shape index: {}]
  %s3 = inlined_call_operand.hbm [shape: bf16[64,512], index: 3, kind: input, shape index: {}]
  %s4 = inlined_call_operand.hbm [shape: bf16[64,384], index: 4, kind: input, shape index: {}]
  %s5 = inlined_call_operand.hbm [shape: bf16[64,1024], index: 5, kind: input, shape index: {}]
  %s6 = inlined_call_operand.hbm [shape: bf16[256,1024], index: 6, kind: input, shape index: {}]
  %s7 = inlined_call_operand.vmem [shape: f32[64,1], index: 7, kind: input, shape index: {}]
  %s8 = inlined_call_operand.hbm [shape: f32[64,1024], index: 8, kind: output, shape index: {}]
  %s9 = sld [smem:[#allocation0]]
  $region62: #{tpu_custom_call.1} parent=0
    _
  %s11 = ssub.s32 1, %s9
  %s12 = scalar_select 0, %s11, %s9
  $region1: #{tpu_custom_call.1} parent=0
    #allocation2 [shape = 'u8[262144]{0}', space=vmem, size = 0x40000, scoped, tag = 'input window, operand 2, single buffered']
    #allocation3 [shape = 's32[1]{0}', space=sflag, size = 0x4, scoped, tag = 'scoped memory for tpu_custom_call.1']
    #allocation4 [shape = 's32[1]{0}', space=sflag, size = 0x4, scoped, tag = 'scoped memory for tpu_custom_call.1']
    #allocation5 [shape = 'u8[65536]{0}', space=vmem, size = 0x10000, scoped, tag = 'input window, operand 3, single buffered']
    #allocation6 [shape = 's32[1]{0}', space=sflag, size = 0x4, scoped, tag = 'scoped memory for tpu_custom_call.1']
    #allocation7 [shape = 'u8[49152]{0}', space=vmem, size = 0xc000, scoped, tag = 'input window, operand 4, single buffered']
    #allocation8 [shape = 'u8[131072]{0}', space=vmem, size = 0x20000, scoped, tag = 'input window, operand 5, single buffered']
    #allocation9 [shape = 's32[1]{0}', space=sflag, size = 0x4, scoped, tag = 'scoped memory for tpu_custom_call.1']
    #allocation10 [shape = 'u8[524288]{0}', space=vmem, size = 0x80000, scoped, tag = 'input window, operand 6, single buffered']
    #allocation11 [shape = 'u8[262144]{0}', space=vmem, size = 0x40000, scoped, tag = 'output window, operand 0, single buffered']
    %13 = vsyncpa [#allocation3], 0
    %14 = vsyncpa [#allocation6], 0
    %15 = vsyncpa [#allocation9], 0
    %16 = vsyncpa [#allocation4], 0
    // Predicated region
    $region2: #{tpu_custom_call.1} parent=1 // pred_check
      _
    $region3: #{tpu_custom_call.1} parent=1 // pred_check_branch
      %18 = sbr.rel (0) target = $region5
    $region4: #{tpu_custom_call.1} parent=1 // pred_region
      _
    $region5: #{tpu_custom_call.1} parent=1 // pred_fallthru
      _
    // Predicated region
    $region6: #{tpu_custom_call.1} parent=1 // pred_check
      _
    $region7: #{tpu_custom_call.1} parent=1 // pred_check_branch
      %20 = sbr.rel (0) target = $region9
    $region8: #{tpu_custom_call.1} parent=1 // pred_region
      _
    $region9: #{tpu_custom_call.1} parent=1 // pred_fallthru
      _
    // Predicated region
    $region10: #{tpu_custom_call.1} parent=1 // pred_check
      _
    $region11: #{tpu_custom_call.1} parent=1 // pred_check_branch
      %22 = sbr.rel (0) target = $region13
    $region12: #{tpu_custom_call.1} parent=1 // pred_region
      %s24 = ssub.s32 8192, 8192
      %25 = vsyncadd [#allocation3], %s24
      %s26 = sshll.u32 [#allocation2], 4
      %s27 = int_to_ptr.vmem [resolvable:$true] %s26
      %32 = dma.hbm_to_vmem [thread:$0]  %s2, 8192, %s27, [#allocation3], 1024, 1024, 64
    $region13: #{tpu_custom_call.1} parent=1 // pred_fallthru
      _
    // Predicated region
    $region14: #{tpu_custom_call.1} parent=1 // pred_check
      _
    $region15: #{tpu_custom_call.1} parent=1 // pred_check_branch
      %34 = sbr.rel (0) target = $region17
    $region16: #{tpu_custom_call.1} parent=1 // pred_region
      %s36 = ssub.s32 2048, 2048
      %37 = vsyncadd [#allocation6], %s36
      %s38 = sshll.u32 [#allocation5], 4
      %s39 = int_to_ptr.vmem [resolvable:$true] %s38
      %44 = dma.hbm_to_vmem [thread:$0]  %s3, 2048, %s39, [#allocation6], 256, 256, 16
    $region17: #{tpu_custom_call.1} parent=1 // pred_fallthru
      _
    // Predicated region
    $region18: #{tpu_custom_call.1} parent=1 // pred_check
      _
    $region19: #{tpu_custom_call.1} parent=1 // pred_check_branch
      %46 = sbr.rel (0) target = $region21
    $region20: #{tpu_custom_call.1} parent=1 // pred_region
      %s48 = ssub.s32 1536, 1536
      %49 = vsyncadd [#allocation6], %s48
      %s50 = sshll.u32 [#allocation7], 4
      %s51 = int_to_ptr.vmem [resolvable:$true] %s50
      %56 = dma.hbm_to_vmem [thread:$0]  %s4, 1536, %s51, [#allocation6], 192, 192, 12
    $region21: #{tpu_custom_call.1} parent=1 // pred_fallthru
      _
    // Predicated region
    $region22: #{tpu_custom_call.1} parent=1 // pred_check
      _
    $region23: #{tpu_custom_call.1} parent=1 // pred_check_branch
      %58 = sbr.rel (0) target = $region25
    $region24: #{tpu_custom_call.1} parent=1 // pred_region
      %s60 = ssub.s32 4096, 4096
      %61 = vsyncadd [#allocation9], %s60
      %s62 = sshll.u32 [#allocation8], 4
      %s63 = int_to_ptr.vmem [resolvable:$true] %s62
      %68 = dma.hbm_to_vmem [thread:$0]  %s5, 4096, %s63, [#allocation9], 512, 512, 32
    $region25: #{tpu_custom_call.1} parent=1 // pred_fallthru
      _
    // Predicated region
    $region26: #{tpu_custom_call.1} parent=1 // pred_check
      _
    $region27: #{tpu_custom_call.1} parent=1 // pred_check_branch
      %70 = sbr.rel (0) target = $region29
    $region28: #{tpu_custom_call.1} parent=1 // pred_region
      %s72 = ssub.s32 16384, 16384
      %73 = vsyncadd [#allocation9], %s72
      %s74 = sshll.u32 [#allocation10], 4
      %s75 = int_to_ptr.vmem [resolvable:$true] %s74
      %80 = dma.hbm_to_vmem [thread:$0]  %s6, 16384, %s75, [#allocation9], 512, 512, 32
    $region29: #{tpu_custom_call.1} parent=1 // pred_fallthru
      _
    // Predicated region
    $region30: #{tpu_custom_call.1} parent=1 // pred_check
      _
    $region31: #{tpu_custom_call.1} parent=1 // pred_check_branch
      %82 = sbr.rel (0) target = $region33
    $region32: #{tpu_custom_call.1} parent=1 // pred_region
      _
    $region33: #{tpu_custom_call.1} parent=1 // pred_fallthru
      _
    // Predicated region
    $region34: #{tpu_custom_call.1} parent=1 // pred_check
      _
    $region35: #{tpu_custom_call.1} parent=1 // pred_check_branch
      %84 = sbr.rel (0) target = $region37
    $region36: #{tpu_custom_call.1} parent=1 // pred_region
      %85 = dma.done [#allocation3], 8192
    $region37: #{tpu_custom_call.1} parent=1 // pred_fallthru
      _
    // Predicated region
    $region38: #{tpu_custom_call.1} parent=1 // pred_check
      _
    $region39: #{tpu_custom_call.1} parent=1 // pred_check_branch
      %87 = sbr.rel (0) target = $region41
    $region40: #{tpu_custom_call.1} parent=1 // pred_region
      %88 = dma.done [#allocation6], 2048
    $region41: #{tpu_custom_call.1} parent=1 // pred_fallthru
      _
    // Predicated region
    $region42: #{tpu_custom_call.1} parent=1 // pred_check
      _
    $region43: #{tpu_custom_call.1} parent=1 // pred_check_branch
      %90 = sbr.rel (0) target = $region45
    $region44: #{tpu_custom_call.1} parent=1 // pred_region
      %91 = dma.done [#allocation6], 1536
    $region45: #{tpu_custom_call.1} parent=1 // pred_fallthru
      _
    // Predicated region
    $region46: #{tpu_custom_call.1} parent=1 // pred_check
      _
    $region47: #{tpu_custom_call.1} parent=1 // pred_check_branch
      %93 = sbr.rel (0) target = $region49
    $region48: #{tpu_custom_call.1} parent=1 // pred_region
      %94 = dma.done [#allocation9], 4096
    $region49: #{tpu_custom_call.1} parent=1 // pred_fallthru
      _
    // Predicated region
    $region50: #{tpu_custom_call.1} parent=1 // pred_check
      _
    $region51: #{tpu_custom_call.1} parent=1 // pred_check_branch
      %96 = sbr.rel (0) target = $region53
    $region52: #{tpu_custom_call.1} parent=1 // pred_region
      %97 = dma.done [#allocation9], 16384
    $region53: #{tpu_custom_call.1} parent=1 // pred_fallthru
      _
    %v99 = vld [vmem:[#allocation5] sm:$0xff]
    %v100 = vld [vmem:[#allocation5 + $0x8] sm:$0xff]
    %v101 = vld [vmem:[#allocation5 + $0x10] sm:$0xff]
    %v102 = vld [vmem:[#allocation5 + $0x18] sm:$0xff]
    %v103 = vld [vmem:[#allocation5 + $0x20] sm:$0xff]
    %v104 = vld [vmem:[#allocation5 + $0x28] sm:$0xff]
    %v105 = vld [vmem:[#allocation5 + $0x30] sm:$0xff]
    %v106 = vld [vmem:[#allocation5 + $0x38] sm:$0xff]
    %v107 = vld [vmem:[#allocation5 + $0x40] sm:$0xff]
    %v108 = vld [vmem:[#allocation5 + $0x48] sm:$0xff]
    %v109 = vld [vmem:[#allocation5 + $0x50] sm:$0xff]
    %v110 = vld [vmem:[#allocation5 + $0x58] sm:$0xff]
    %v111 = vld [vmem:[#allocation5 + $0x60] sm:$0xff]
    %v112 = vld [vmem:[#allocation5 + $0x68] sm:$0xff]
    %v113 = vld [vmem:[#allocation5 + $0x70] sm:$0xff]
    %v114 = vld [vmem:[#allocation5 + $0x78] sm:$0xff]
    %v115 = vld [vmem:[%s0] sm:$0xf]
    %v116 = vld [vmem:[%s0 + $0x4] sm:$0xf]
    %v117 = vld [vmem:[%s0 + $0x8] sm:$0xf]
    %v118 = vld [vmem:[%s0 + $0xc] sm:$0xf]
    %v119 = vld [vmem:[%s0 + $0x10] sm:$0xf]
    %v120 = vld [vmem:[%s0 + $0x14] sm:$0xf]
    %v121 = vld [vmem:[%s0 + $0x18] sm:$0xf]
    %v122 = vld [vmem:[%s0 + $0x1c] sm:$0xf]
    %v123 = vld [vmem:[%s0 + $0x20] sm:$0xf]
    %v124 = vld [vmem:[%s0 + $0x24] sm:$0xf]
    %v125 = vld [vmem:[%s0 + $0x28] sm:$0xf]
    %v126 = vld [vmem:[%s0 + $0x2c] sm:$0xf]
    %v127 = vld [vmem:[%s0 + $0x30] sm:$0xf]
    %v128 = vld [vmem:[%s0 + $0x34] sm:$0xf]
    %v129 = vld [vmem:[%s0 + $0x38] sm:$0xf]
    %v130 = vld [vmem:[%s0 + $0x3c] sm:$0xf]
    %v131 = vld [vmem:[%s0 + $0x40] sm:$0xf]
    %v132 = vld [vmem:[%s0 + $0x44] sm:$0xf]
    %v133 = vld [vmem:[%s0 + $0x48] sm:$0xf]
    %v134 = vld [vmem:[%s0 + $0x4c] sm:$0xf]
    %v135 = vld [vmem:[%s0 + $0x50] sm:$0xf]
    %v136 = vld [vmem:[%s0 + $0x54] sm:$0xf]
    %v137 = vld [vmem:[%s0 + $0x58] sm:$0xf]
    %v138 = vld [vmem:[%s0 + $0x5c] sm:$0xf]
    %v139 = vld [vmem:[%s0 + $0x60] sm:$0xf]
    %v140 = vld [vmem:[%s0 + $0x64] sm:$0xf]
    %v141 = vld [vmem:[%s0 + $0x68] sm:$0xf]
    %v142 = vld [vmem:[%s0 + $0x6c] sm:$0xf]
    %v143 = vld [vmem:[%s0 + $0x70] sm:$0xf]
    %v144 = vld [vmem:[%s0 + $0x74] sm:$0xf]
    %v145 = vld [vmem:[%s0 + $0x78] sm:$0xf]
    %v146 = vld [vmem:[%s0 + $0x7c] sm:$0xf]
    %v147 = vld [vmem:[%s0 + $0x80] sm:$0xf]
    %v148 = vld [vmem:[%s0 + $0x84] sm:$0xf]
    %v149 = vld [vmem:[%s0 + $0x88] sm:$0xf]
    %v150 = vld [vmem:[%s0 + $0x8c] sm:$0xf]
    %v151 = vld [vmem:[%s0 + $0x90] sm:$0xf]
    %v152 = vld [vmem:[%s0 + $0x94] sm:$0xf]
    %v153 = vld [vmem:[%s0 + $0x98] sm:$0xf]
    %v154 = vld [vmem:[%s0 + $0x9c] sm:$0xf]
    %v155 = vld [vmem:[%s0 + $0xa0] sm:$0xf]
    %v156 = vld [vmem:[%s0 + $0xa4] sm:$0xf]
    %v157 = vld [vmem:[%s0 + $0xa8] sm:$0xf]
    %v158 = vld [vmem:[%s0 + $0xac] sm:$0xf]
    %v159 = vld [vmem:[%s0 + $0xb0] sm:$0xf]
    %v160 = vld [vmem:[%s0 + $0xb4] sm:$0xf]
    %v161 = vld [vmem:[%s0 + $0xb8] sm:$0xf]
    %v162 = vld [vmem:[%s0 + $0xbc] sm:$0xf]
    %v163 = vld [vmem:[%s0 + $0xc0] sm:$0xf]
    %v164 = vld [vmem:[%s0 + $0xc4] sm:$0xf]
    %v165 = vld [vmem:[%s0 + $0xc8] sm:$0xf]
    %v166 = vld [vmem:[%s0 + $0xcc] sm:$0xf]
    %v167 = vld [vmem:[%s0 + $0xd0] sm:$0xf]
    %v168 = vld [vmem:[%s0 + $0xd4] sm:$0xf]
    %v169 = vld [vmem:[%s0 + $0xd8] sm:$0xf]
    %v170 = vld [vmem:[%s0 + $0xdc] sm:$0xf]
    %v171 = vld [vmem:[%s0 + $0xe0] sm:$0xf]
    %v172 = vld [vmem:[%s0 + $0xe4] sm:$0xf]
    %v173 = vld [vmem:[%s0 + $0xe8] sm:$0xf]
    %v174 = vld [vmem:[%s0 + $0xec] sm:$0xf]
    %v175 = vld [vmem:[%s0 + $0xf0] sm:$0xf]
    %v176 = vld [vmem:[%s0 + $0xf4] sm:$0xf]
    %v177 = vld [vmem:[%s0 + $0xf8] sm:$0xf]
    %v178 = vld [vmem:[%s0 + $0xfc] sm:$0xf]
    %v195 = vunpack.c.l.b16 %v99
    %v196 = vunpack.c.h.b16 %v99
    %v197 = vunpack.c.l.b16 %v100
    %v198 = vunpack.c.h.b16 %v100
    %v199 = vunpack.c.l.b16 %v101
    %v200 = vunpack.c.h.b16 %v101
    %v201 = vunpack.c.l.b16 %v102
    %v202 = vunpack.c.h.b16 %v102
    %v203 = vunpack.c.l.b16 %v103
    %v204 = vunpack.c.h.b16 %v103
    %v205 = vunpack.c.l.b16 %v104
    %v206 = vunpack.c.h.b16 %v104
    %v207 = vunpack.c.l.b16 %v105
    %v208 = vunpack.c.h.b16 %v105
    %v209 = vunpack.c.l.b16 %v106
    %v210 = vunpack.c.h.b16 %v106
    %v211 = vunpack.c.l.b16 %v107
    %v212 = vunpack.c.h.b16 %v107
    %v213 = vunpack.c.l.b16 %v108
    %v214 = vunpack.c.h.b16 %v108
    %v215 = vunpack.c.l.b16 %v109
    %v216 = vunpack.c.h.b16 %v109
    %v217 = vunpack.c.l.b16 %v110
    %v218 = vunpack.c.h.b16 %v110
    %v219 = vunpack.c.l.b16 %v111
    %v220 = vunpack.c.h.b16 %v111
    %v221 = vunpack.c.l.b16 %v112
    %v222 = vunpack.c.h.b16 %v112
    %v223 = vunpack.c.l.b16 %v113
    %v224 = vunpack.c.h.b16 %v113
    %v225 = vunpack.c.l.b16 %v114
    %v226 = vunpack.c.h.b16 %v114
    %v227 = vpack.c.b16 %v199, %v195
    %v228 = vpack.c.b16 %v200, %v196
    %v229 = vpack.c.b16 %v201, %v197
    %v230 = vpack.c.b16 %v202, %v198
    %v231 = vpack.c.b16 %v207, %v203
    %v232 = vpack.c.b16 %v208, %v204
    %v233 = vpack.c.b16 %v209, %v205
    %v234 = vpack.c.b16 %v210, %v206
    %v235 = vpack.c.b16 %v215, %v211
    %v236 = vpack.c.b16 %v216, %v212
    %v237 = vpack.c.b16 %v217, %v213
    %v238 = vpack.c.b16 %v218, %v214
    %v239 = vpack.c.b16 %v223, %v219
    %v240 = vpack.c.b16 %v224, %v220
    %v241 = vpack.c.b16 %v225, %v221
    %v242 = vpack.c.b16 %v226, %v222
    %v323 = vunpack.c.l.b16 %v115
    %v324 = vunpack.c.l.b16 %v116
    %v325 = vunpack.c.l.b16 %v117
    %v326 = vunpack.c.l.b16 %v118
    %v327 = vunpack.c.l.b16 %v119
    %v328 = vunpack.c.l.b16 %v120
    %v329 = vunpack.c.l.b16 %v121
    %v330 = vunpack.c.l.b16 %v122
    %v331 = vunpack.c.l.b16 %v123
    %v332 = vunpack.c.l.b16 %v124
    %v333 = vunpack.c.l.b16 %v125
    %v334 = vunpack.c.l.b16 %v126
    %v335 = vunpack.c.l.b16 %v127
    %v336 = vunpack.c.l.b16 %v128
    %v337 = vunpack.c.l.b16 %v129
    %v338 = vunpack.c.l.b16 %v130
    %v339 = vunpack.c.l.b16 %v131
    %v340 = vunpack.c.l.b16 %v132
    %v341 = vunpack.c.l.b16 %v133
    %v342 = vunpack.c.l.b16 %v134
    %v343 = vunpack.c.l.b16 %v135
    %v344 = vunpack.c.l.b16 %v136
    %v345 = vunpack.c.l.b16 %v137
    %v346 = vunpack.c.l.b16 %v138
    %v347 = vunpack.c.l.b16 %v139
    %v348 = vunpack.c.l.b16 %v140
    %v349 = vunpack.c.l.b16 %v141
    %v350 = vunpack.c.l.b16 %v142
    %v351 = vunpack.c.l.b16 %v143
    %v352 = vunpack.c.l.b16 %v144
    %v353 = vunpack.c.l.b16 %v145
    %v354 = vunpack.c.l.b16 %v146
    %v355 = vunpack.c.l.b16 %v147
    %v356 = vunpack.c.l.b16 %v148
    %v357 = vunpack.c.l.b16 %v149
    %v358 = vunpack.c.l.b16 %v150
    %v359 = vunpack.c.l.b16 %v151
    %v360 = vunpack.c.l.b16 %v152
    %v361 = vunpack.c.l.b16 %v153
    %v362 = vunpack.c.l.b16 %v154
    %v363 = vunpack.c.l.b16 %v155
    %v364 = vunpack.c.l.b16 %v156
    %v365 = vunpack.c.l.b16 %v157
    %v366 = vunpack.c.l.b16 %v158
    %v367 = vunpack.c.l.b16 %v159
    %v368 = vunpack.c.l.b16 %v160
    %v369 = vunpack.c.l.b16 %v161
    %v370 = vunpack.c.l.b16 %v162
    %v371 = vunpack.c.l.b16 %v163
    %v372 = vunpack.c.l.b16 %v164
    %v373 = vunpack.c.l.b16 %v165
    %v374 = vunpack.c.l.b16 %v166
    %v375 = vunpack.c.l.b16 %v167
    %v376 = vunpack.c.l.b16 %v168
    %v377 = vunpack.c.l.b16 %v169
    %v378 = vunpack.c.l.b16 %v170
    %v379 = vunpack.c.l.b16 %v171
    %v380 = vunpack.c.l.b16 %v172
    %v381 = vunpack.c.l.b16 %v173
    %v382 = vunpack.c.l.b16 %v174
    %v383 = vunpack.c.l.b16 %v175
    %v384 = vunpack.c.l.b16 %v176
    %v385 = vunpack.c.l.b16 %v177
    %v386 = vunpack.c.l.b16 %v178
    %v387 = vpack.c.b16 %v324, %v323
    %v388 = vpack.c.b16 %v326, %v325
    %v389 = vpack.c.b16 %v328, %v327
    %v390 = vpack.c.b16 %v330, %v329
    %v391 = vpack.c.b16 %v332, %v331
    %v392 = vpack.c.b16 %v334, %v333
    %v393 = vpack.c.b16 %v336, %v335
    %v394 = vpack.c.b16 %v338, %v337
    %v395 = vpack.c.b16 %v340, %v339
    %v396 = vpack.c.b16 %v342, %v341
    %v397 = vpack.c.b16 %v344, %v343
    %v398 = vpack.c.b16 %v346, %v345
    %v399 = vpack.c.b16 %v348, %v347
    %v400 = vpack.c.b16 %v350, %v349
    %v401 = vpack.c.b16 %v352, %v351
    %v402 = vpack.c.b16 %v354, %v353
    %v403 = vpack.c.b16 %v356, %v355
    %v404 = vpack.c.b16 %v358, %v357
    %v405 = vpack.c.b16 %v360, %v359
    %v406 = vpack.c.b16 %v362, %v361
    %v407 = vpack.c.b16 %v364, %v363
    %v408 = vpack.c.b16 %v366, %v365
    %v409 = vpack.c.b16 %v368, %v367
    %v410 = vpack.c.b16 %v370, %v369
    %v411 = vpack.c.b16 %v372, %v371
    %v412 = vpack.c.b16 %v374, %v373
    %v413 = vpack.c.b16 %v376, %v375
    %v414 = vpack.c.b16 %v378, %v377
    %v415 = vpack.c.b16 %v380, %v379
    %v416 = vpack.c.b16 %v382, %v381
    %v417 = vpack.c.b16 %v384, %v383
    %v418 = vpack.c.b16 %v386, %v385
    %451 = vmatprep.subr.bf16.mxu0 0
    %452 = vmatpush1.bf16.msra.mxu0 %v387
    %453 = vmatprep.subr.bf16.mxu0 0
    %454 = vmatpush1.bf16.msra.mxu0 %v388
    %455 = vmatprep.subr.bf16.mxu0 0
    %456 = vmatpush1.bf16.msra.mxu0 %v389
    %457 = vmatprep.subr.bf16.mxu0 0
    %458 = vmatpush1.bf16.msra.mxu0 %v390
    %459 = vmatprep.subr.bf16.mxu0 0
    %460 = vmatpush1.bf16.msra.mxu0 %v391
    %461 = vmatprep.subr.bf16.mxu0 0
    %462 = vmatpush1.bf16.msra.mxu0 %v392
    %463 = vmatprep.subr.bf16.mxu0 0
    %464 = vmatpush1.bf16.msra.mxu0 %v393
    %465 = vmatprep.subr.bf16.mxu0 0
    %466 = vmatpush1.bf16.msra.mxu0 %v394
    %467 = vmatprep.subr.bf16.mxu0 0
    %468 = vmatpush1.bf16.msra.mxu0 %v395
    %469 = vmatprep.subr.bf16.mxu0 0
    %470 = vmatpush1.bf16.msra.mxu0 %v396
    %471 = vmatprep.subr.bf16.mxu0 0
    %472 = vmatpush1.bf16.msra.mxu0 %v397
    %473 = vmatprep.subr.bf16.mxu0 0
    %474 = vmatpush1.bf16.msra.mxu0 %v398
    %475 = vmatprep.subr.bf16.mxu0 0
    %476 = vmatpush1.bf16.msra.mxu0 %v399
    %477 = vmatprep.subr.bf16.mxu0 0
    %478 = vmatpush1.bf16.msra.mxu0 %v400
    %479 = vmatprep.subr.bf16.mxu0 0
    %480 = vmatpush1.bf16.msra.mxu0 %v401
    %481 = vmatprep.subr.bf16.mxu0 0
    %482 = vmatpush1.bf16.msra.mxu0 %v402
    %483 = vmatprep.mubr.bf16.mxu0 %v228
    %484 = vmatmul.mubr.bf16.gmra.mrb[0].mxu0 %v227
    %v485 = vpop.f32.mrb[0].mxu0
    %v486 = vadd.f32 0.0, %v485
    %v487 = vpop.f32.mrb[0].mxu0
    %v488 = vpop.f32.mrb[0].mxu0
    %v489 = vadd.f32 0.0, %v488
    %v490 = vpop.f32.mrb[0].mxu0
    %491 = vmatprep.mubr.bf16.mxu0 %v232
    %492 = vmatmul.mubr.bf16.gmra.mrb[0].mxu0 %v231
    %v493 = vpop.f32.mrb[0].mxu0
    %v494 = vadd.f32 0.0, %v493
    %v495 = vpop.f32.mrb[0].mxu0
    %v496 = vpop.f32.mrb[0].mxu0
    %v497 = vadd.f32 0.0, %v496
    %v498 = vpop.f32.mrb[0].mxu0
    %499 = vmatprep.mubr.bf16.mxu0 %v236
    %500 = vmatmul.mubr.bf16.gmra.mrb[0].mxu0 %v235
    %v501 = vpop.f32.mrb[0].mxu0
    %v502 = vadd.f32 0.0, %v501
    %v503 = vpop.f32.mrb[0].mxu0
    %v504 = vpop.f32.mrb[0].mxu0
    %v505 = vadd.f32 0.0, %v504
    %v506 = vpop.f32.mrb[0].mxu0
    %507 = vmatprep.mubr.bf16.mxu0 %v240
    %508 = vmatmul.mubr.bf16.gmra.mrb[0].mxu0 %v239
    %v509 = vpop.f32.mrb[0].mxu0
    %v510 = vadd.f32 0.0, %v509
    %v511 = vpop.f32.mrb[0].mxu0
    %v512 = vpop.f32.mrb[0].mxu0
    %v513 = vadd.f32 0.0, %v512
    %v514 = vpop.f32.mrb[0].mxu0
    %515 = vdwg.mxu0
    %516 = vmatprep.subr.bf16.mxu0 0
    %517 = vmatpush1.bf16.msra.mxu0 %v403
    %518 = vmatprep.subr.bf16.mxu0 0
    %519 = vmatpush1.bf16.msra.mxu0 %v404
    %520 = vmatprep.subr.bf16.mxu0 0
    %521 = vmatpush1.bf16.msra.mxu0 %v405
    %522 = vmatprep.subr.bf16.mxu0 0
    %523 = vmatpush1.bf16.msra.mxu0 %v406
    %524 = vmatprep.subr.bf16.mxu0 0
    %525 = vmatpush1.bf16.msra.mxu0 %v407
    %526 = vmatprep.subr.bf16.mxu0 0
    %527 = vmatpush1.bf16.msra.mxu0 %v408
    %528 = vmatprep.subr.bf16.mxu0 0
    %529 = vmatpush1.bf16.msra.mxu0 %v409
    %530 = vmatprep.subr.bf16.mxu0 0
    %531 = vmatpush1.bf16.msra.mxu0 %v410
    %532 = vmatprep.subr.bf16.mxu0 0
    %533 = vmatpush1.bf16.msra.mxu0 %v411
    %534 = vmatprep.subr.bf16.mxu0 0
    %535 = vmatpush1.bf16.msra.mxu0 %v412
    %536 = vmatprep.subr.bf16.mxu0 0
    %537 = vmatpush1.bf16.msra.mxu0 %v413
    %538 = vmatprep.subr.bf16.mxu0 0
    %539 = vmatpush1.bf16.msra.mxu0 %v414
    %540 = vmatprep.subr.bf16.mxu0 0
    %541 = vmatpush1.bf16.msra.mxu0 %v415
    %542 = vmatprep.subr.bf16.mxu0 0
    %543 = vmatpush1.bf16.msra.mxu0 %v416
    %544 = vmatprep.subr.bf16.mxu0 0
    %545 = vmatpush1.bf16.msra.mxu0 %v417
    %546 = vmatprep.subr.bf16.mxu0 0
    %547 = vmatpush1.bf16.msra.mxu0 %v418
    %548 = vmatprep.mubr.bf16.mxu0 %v230
    %549 = vmatmul.mubr.bf16.gmra.mrb[0].mxu0 %v229
    %v550 = vpop.f32.mrb[0].mxu0
    %v551 = vadd.f32 %v486, %v550
    %v552 = vpop.f32.mrb[0].mxu0
    %v553 = vpop.f32.mrb[0].mxu0
    %v554 = vadd.f32 %v489, %v553
    %v555 = vpop.f32.mrb[0].mxu0
    %556 = vmatprep.mubr.bf16.mxu0 %v234
    %557 = vmatmul.mubr.bf16.gmra.mrb[0].mxu0 %v233
    %v558 = vpop.f32.mrb[0].mxu0
    %v559 = vadd.f32 %v494, %v558
    %v560 = vpop.f32.mrb[0].mxu0
    %v561 = vpop.f32.mrb[0].mxu0
    %v562 = vadd.f32 %v497, %v561
    %v563 = vpop.f32.mrb[0].mxu0
    %564 = vmatprep.mubr.bf16.mxu0 %v238
    %565 = vmatmul.mubr.bf16.gmra.mrb[0].mxu0 %v237
    %v566 = vpop.f32.mrb[0].mxu0
    %v567 = vadd.f32 %v502, %v566
    %v568 = vpop.f32.mrb[0].mxu0
    %v569 = vpop.f32.mrb[0].mxu0
    %v570 = vadd.f32 %v505, %v569
    %v571 = vpop.f32.mrb[0].mxu0
    %572 = vmatprep.mubr.bf16.mxu0 %v242
    %573 = vmatmul.mubr.bf16.gmra.mrb[0].mxu0 %v241
    %v574 = vpop.f32.mrb[0].mxu0
    %v575 = vadd.f32 %v510, %v574
    %v576 = vpop.f32.mrb[0].mxu0
    %v577 = vpop.f32.mrb[0].mxu0
    %v578 = vadd.f32 %v513, %v577
    %v579 = vpop.f32.mrb[0].mxu0
    %580 = vdwg.mxu0
    %v581 = vld [vmem:[#allocation7] sm:$0xff]
    %v582 = vld [vmem:[#allocation7 + $0x8] sm:$0xf]
    %v583 = vld [vmem:[#allocation7 + $0xc] sm:$0xff]
    %v584 = vld [vmem:[#allocation7 + $0x14] sm:$0xf]
    %v585 = vld [vmem:[#allocation7 + $0x18] sm:$0xff]
    %v586 = vld [vmem:[#allocation7 + $0x20] sm:$0xf]
    %v587 = vld [vmem:[#allocation7 + $0x24] sm:$0xff]
    %v588 = vld [vmem:[#allocation7 + $0x2c] sm:$0xf]
    %v589 = vld [vmem:[#allocation7 + $0x30] sm:$0xff]
    %v590 = vld [vmem:[#allocation7 + $0x38] sm:$0xf]
    %v591 = vld [vmem:[#allocation7 + $0x3c] sm:$0xff]
    %v592 = vld [vmem:[#allocation7 + $0x44] sm:$0xf]
    %v593 = vld [vmem:[#allocation7 + $0x48] sm:$0xff]
    %v594 = vld [vmem:[#allocation7 + $0x50] sm:$0xf]
    %v595 = vld [vmem:[#allocation7 + $0x54] sm:$0xff]
    %v596 = vld [vmem:[#allocation7 + $0x5c] sm:$0xf]
    %v597 = vld [vmem:[%s1] sm:$0xff]
    %v598 = vld [vmem:[%s1 + $0x8] sm:$0xff]
    %v599 = vld [vmem:[%s1 + $0x10] sm:$0xff]
    %v600 = vld [vmem:[%s1 + $0x18] sm:$0xff]
    %v601 = vld [vmem:[%s1 + $0x20] sm:$0xff]
    %v602 = vld [vmem:[%s1 + $0x28] sm:$0xff]
    %v603 = vld [vmem:[%s1 + $0x30] sm:$0xff]
    %v604 = vld [vmem:[%s1 + $0x38] sm:$0xff]
    %v605 = vld [vmem:[%s1 + $0x40] sm:$0xff]
    %v606 = vld [vmem:[%s1 + $0x48] sm:$0xff]
    %v607 = vld [vmem:[%s1 + $0x50] sm:$0xff]
    %v608 = vld [vmem:[%s1 + $0x58] sm:$0xff]
    %v609 = vld [vmem:[%s1 + $0x60] sm:$0xff]
    %v610 = vld [vmem:[%s1 + $0x68] sm:$0xff]
    %v611 = vld [vmem:[%s1 + $0x70] sm:$0xff]
    %v612 = vld [vmem:[%s1 + $0x78] sm:$0xff]
    %v613 = vld [vmem:[%s1 + $0x80] sm:$0xff]
    %v614 = vld [vmem:[%s1 + $0x88] sm:$0xff]
    %v615 = vld [vmem:[%s1 + $0x90] sm:$0xff]
    %v616 = vld [vmem:[%s1 + $0x98] sm:$0xff]
    %v617 = vld [vmem:[%s1 + $0xa0] sm:$0xff]
    %v618 = vld [vmem:[%s1 + $0xa8] sm:$0xff]
    %v619 = vld [vmem:[%s1 + $0xb0] sm:$0xff]
    %v620 = vld [vmem:[%s1 + $0xb8] sm:$0xff]
    %v621 = vld [vmem:[%s1 + $0xc0] sm:$0xff]
    %v622 = vld [vmem:[%s1 + $0xc8] sm:$0xff]
    %v623 = vld [vmem:[%s1 + $0xd0] sm:$0xff]
    %v624 = vld [vmem:[%s1 + $0xd8] sm:$0xff]
    %v625 = vld [vmem:[%s1 + $0xe0] sm:$0xff]
    %v626 = vld [vmem:[%s1 + $0xe8] sm:$0xff]
    %v627 = vld [vmem:[%s1 + $0xf0] sm:$0xff]
    %v628 = vld [vmem:[%s1 + $0xf8] sm:$0xff]
    %v629 = vld [vmem:[%s1 + $0x100] sm:$0xff]
    %v630 = vld [vmem:[%s1 + $0x108] sm:$0xff]
    %v631 = vld [vmem:[%s1 + $0x110] sm:$0xff]
    %v632 = vld [vmem:[%s1 + $0x118] sm:$0xff]
    %v633 = vld [vmem:[%s1 + $0x120] sm:$0xff]
    %v634 = vld [vmem:[%s1 + $0x128] sm:$0xff]
    %v635 = vld [vmem:[%s1 + $0x130] sm:$0xff]
    %v636 = vld [vmem:[%s1 + $0x138] sm:$0xff]
    %v637 = vld [vmem:[%s1 + $0x140] sm:$0xff]
    %v638 = vld [vmem:[%s1 + $0x148] sm:$0xff]
    %v639 = vld [vmem:[%s1 + $0x150] sm:$0xff]
    %v640 = vld [vmem:[%s1 + $0x158] sm:$0xff]
    %v641 = vld [vmem:[%s1 + $0x160] sm:$0xff]
    %v642 = vld [vmem:[%s1 + $0x168] sm:$0xff]
    %v643 = vld [vmem:[%s1 + $0x170] sm:$0xff]
    %v644 = vld [vmem:[%s1 + $0x178] sm:$0xff]
    %v661 = vunpack.c.l.b16 %v581
    %v662 = vunpack.c.h.b16 %v581
    %v663 = vunpack.c.l.b16 %v582
    %v664 = vunpack.c.l.b16 %v583
    %v665 = vunpack.c.h.b16 %v583
    %v666 = vunpack.c.l.b16 %v584
    %v667 = vunpack.c.l.b16 %v585
    %v668 = vunpack.c.h.b16 %v585
    %v669 = vunpack.c.l.b16 %v586
    %v670 = vunpack.c.l.b16 %v587
    %v671 = vunpack.c.h.b16 %v587
    %v672 = vunpack.c.l.b16 %v588
    %v673 = vunpack.c.l.b16 %v589
    %v674 = vunpack.c.h.b16 %v589
    %v675 = vunpack.c.l.b16 %v590
    %v676 = vunpack.c.l.b16 %v591
    %v677 = vunpack.c.h.b16 %v591
    %v678 = vunpack.c.l.b16 %v592
    %v679 = vunpack.c.l.b16 %v593
    %v680 = vunpack.c.h.b16 %v593
    %v681 = vunpack.c.l.b16 %v594
    %v682 = vunpack.c.l.b16 %v595
    %v683 = vunpack.c.h.b16 %v595
    %v684 = vunpack.c.l.b16 %v596
    %v685 = vpack.c.b16 %v664, %v661
    %v686 = vpack.c.b16 %v665, %v662
    %v687 = vpack.c.b16 %v666, %v663
    %v688 = vpack.c.b16 %v670, %v667
    %v689 = vpack.c.b16 %v671, %v668
    %v690 = vpack.c.b16 %v672, %v669
    %v691 = vpack.c.b16 %v676, %v673
    %v692 = vpack.c.b16 %v677, %v674
    %v693 = vpack.c.b16 %v678, %v675
    %v694 = vpack.c.b16 %v682, %v679
    %v695 = vpack.c.b16 %v683, %v680
    %v696 = vpack.c.b16 %v684, %v681
    %v757 = vunpack.c.l.b16 %v597
    %v758 = vunpack.c.h.b16 %v597
    %v759 = vunpack.c.l.b16 %v598
    %v760 = vunpack.c.h.b16 %v598
    %v761 = vunpack.c.l.b16 %v599
    %v762 = vunpack.c.h.b16 %v599
    %v763 = vunpack.c.l.b16 %v600
    %v764 = vunpack.c.h.b16 %v600
    %v765 = vunpack.c.l.b16 %v601
    %v766 = vunpack.c.h.b16 %v601
    %v767 = vunpack.c.l.b16 %v602
    %v768 = vunpack.c.h.b16 %v602
    %v769 = vunpack.c.l.b16 %v603
    %v770 = vunpack.c.h.b16 %v603
    %v771 = vunpack.c.l.b16 %v604
    %v772 = vunpack.c.h.b16 %v604
    %v773 = vunpack.c.l.b16 %v605
    %v774 = vunpack.c.h.b16 %v605
    %v775 = vunpack.c.l.b16 %v606
    %v776 = vunpack.c.h.b16 %v606
    %v777 = vunpack.c.l.b16 %v607
    %v778 = vunpack.c.h.b16 %v607
    %v779 = vunpack.c.l.b16 %v608
    %v780 = vunpack.c.h.b16 %v608
    %v781 = vunpack.c.l.b16 %v609
    %v782 = vunpack.c.h.b16 %v609
    %v783 = vunpack.c.l.b16 %v610
    %v784 = vunpack.c.h.b16 %v610
    %v785 = vunpack.c.l.b16 %v611
    %v786 = vunpack.c.h.b16 %v611
    %v787 = vunpack.c.l.b16 %v612
    %v788 = vunpack.c.h.b16 %v612
    %v789 = vunpack.c.l.b16 %v613
    %v790 = vunpack.c.h.b16 %v613
    %v791 = vunpack.c.l.b16 %v614
    %v792 = vunpack.c.h.b16 %v614
    %v793 = vunpack.c.l.b16 %v615
    %v794 = vunpack.c.h.b16 %v615
    %v795 = vunpack.c.l.b16 %v616
    %v796 = vunpack.c.h.b16 %v616
    %v797 = vunpack.c.l.b16 %v617
    %v798 = vunpack.c.h.b16 %v617
    %v799 = vunpack.c.l.b16 %v618
    %v800 = vunpack.c.h.b16 %v618
    %v801 = vunpack.c.l.b16 %v619
    %v802 = vunpack.c.h.b16 %v619
    %v803 = vunpack.c.l.b16 %v620
    %v804 = vunpack.c.h.b16 %v620
    %v805 = vunpack.c.l.b16 %v621
    %v806 = vunpack.c.h.b16 %v621
    %v807 = vunpack.c.l.b16 %v622
    %v808 = vunpack.c.h.b16 %v622
    %v809 = vunpack.c.l.b16 %v623
    %v810 = vunpack.c.h.b16 %v623
    %v811 = vunpack.c.l.b16 %v624
    %v812 = vunpack.c.h.b16 %v624
    %v813 = vunpack.c.l.b16 %v625
    %v814 = vunpack.c.h.b16 %v625
    %v815 = vunpack.c.l.b16 %v626
    %v816 = vunpack.c.h.b16 %v626
    %v817 = vunpack.c.l.b16 %v627
    %v818 = vunpack.c.h.b16 %v627
    %v819 = vunpack.c.l.b16 %v628
    %v820 = vunpack.c.h.b16 %v628
    %v821 = vunpack.c.l.b16 %v629
    %v822 = vunpack.c.h.b16 %v629
    %v823 = vunpack.c.l.b16 %v630
    %v824 = vunpack.c.h.b16 %v630
    %v825 = vunpack.c.l.b16 %v631
    %v826 = vunpack.c.h.b16 %v631
    %v827 = vunpack.c.l.b16 %v632
    %v828 = vunpack.c.h.b16 %v632
    %v829 = vunpack.c.l.b16 %v633
    %v830 = vunpack.c.h.b16 %v633
    %v831 = vunpack.c.l.b16 %v634
    %v832 = vunpack.c.h.b16 %v634
    %v833 = vunpack.c.l.b16 %v635
    %v834 = vunpack.c.h.b16 %v635
    %v835 = vunpack.c.l.b16 %v636
    %v836 = vunpack.c.h.b16 %v636
    %v837 = vunpack.c.l.b16 %v637
    %v838 = vunpack.c.h.b16 %v637
    %v839 = vunpack.c.l.b16 %v638
    %v840 = vunpack.c.h.b16 %v638
    %v841 = vunpack.c.l.b16 %v639
    %v842 = vunpack.c.h.b16 %v639
    %v843 = vunpack.c.l.b16 %v640
    %v844 = vunpack.c.h.b16 %v640
    %v845 = vunpack.c.l.b16 %v641
    %v846 = vunpack.c.h.b16 %v641
    %v847 = vunpack.c.l.b16 %v642
    %v848 = vunpack.c.h.b16 %v642
    %v849 = vunpack.c.l.b16 %v643
    %v850 = vunpack.c.h.b16 %v643
    %v851 = vunpack.c.l.b16 %v644
    %v852 = vunpack.c.h.b16 %v644
    %v853 = vpack.c.b16 %v759, %v757
    %v854 = vpack.c.b16 %v760, %v758
    %v855 = vpack.c.b16 %v763, %v761
    %v856 = vpack.c.b16 %v764, %v762
    %v857 = vpack.c.b16 %v767, %v765
    %v858 = vpack.c.b16 %v768, %v766
    %v859 = vpack.c.b16 %v771, %v769
    %v860 = vpack.c.b16 %v772, %v770
    %v861 = vpack.c.b16 %v775, %v773
    %v862 = vpack.c.b16 %v776, %v774
    %v863 = vpack.c.b16 %v779, %v777
    %v864 = vpack.c.b16 %v780, %v778
    %v865 = vpack.c.b16 %v783, %v781
    %v866 = vpack.c.b16 %v784, %v782
    %v867 = vpack.c.b16 %v787, %v785
    %v868 = vpack.c.b16 %v788, %v786
    %v869 = vpack.c.b16 %v791, %v789
    %v870 = vpack.c.b16 %v792, %v790
    %v871 = vpack.c.b16 %v795, %v793
    %v872 = vpack.c.b16 %v796, %v794
    %v873 = vpack.c.b16 %v799, %v797
    %v874 = vpack.c.b16 %v800, %v798
    %v875 = vpack.c.b16 %v803, %v801
    %v876 = vpack.c.b16 %v804, %v802
    %v877 = vpack.c.b16 %v807, %v805
    %v878 = vpack.c.b16 %v808, %v806
    %v879 = vpack.c.b16 %v811, %v809
    %v880 = vpack.c.b16 %v812, %v810
    %v881 = vpack.c.b16 %v815, %v813
    %v882 = vpack.c.b16 %v816, %v814
    %v883 = vpack.c.b16 %v819, %v817
    %v884 = vpack.c.b16 %v820, %v818
    %v885 = vpack.c.b16 %v823, %v821
    %v886 = vpack.c.b16 %v824, %v822
    %v887 = vpack.c.b16 %v827, %v825
    %v888 = vpack.c.b16 %v828, %v826
    %v889 = vpack.c.b16 %v831, %v829
    %v890 = vpack.c.b16 %v832, %v830
    %v891 = vpack.c.b16 %v835, %v833
    %v892 = vpack.c.b16 %v836, %v834
    %v893 = vpack.c.b16 %v839, %v837
    %v894 = vpack.c.b16 %v840, %v838
    %v895 = vpack.c.b16 %v843, %v841
    %v896 = vpack.c.b16 %v844, %v842
    %v897 = vpack.c.b16 %v847, %v845
    %v898 = vpack.c.b16 %v848, %v846
    %v899 = vpack.c.b16 %v851, %v849
    %v900 = vpack.c.b16 %v852, %v850
    %949 = vmatprep.subr.bf16.mxu0 %v854
    %950 = vmatpush1.bf16.msra.mxu0 %v853
    %951 = vmatprep.subr.bf16.mxu0 %v856
    %952 = vmatpush1.bf16.msra.mxu0 %v855
    %953 = vmatprep.subr.bf16.mxu0 %v858
    %954 = vmatpush1.bf16.msra.mxu0 %v857
    %955 = vmatprep.subr.bf16.mxu0 %v860
    %956 = vmatpush1.bf16.msra.mxu0 %v859
    %957 = vmatprep.subr.bf16.mxu0 %v862
    %958 = vmatpush1.bf16.msra.mxu0 %v861
    %959 = vmatprep.subr.bf16.mxu0 %v864
    %960 = vmatpush1.bf16.msra.mxu0 %v863
    %961 = vmatprep.subr.bf16.mxu0 %v866
    %962 = vmatpush1.bf16.msra.mxu0 %v865
    %963 = vmatprep.subr.bf16.mxu0 %v868
    %964 = vmatpush1.bf16.msra.mxu0 %v867
    %965 = vmatprep.subr.bf16.mxu0 %v870
    %966 = vmatpush1.bf16.msra.mxu0 %v869
    %967 = vmatprep.subr.bf16.mxu0 %v872
    %968 = vmatpush1.bf16.msra.mxu0 %v871
    %969 = vmatprep.subr.bf16.mxu0 %v874
    %970 = vmatpush1.bf16.msra.mxu0 %v873
    %971 = vmatprep.subr.bf16.mxu0 %v876
    %972 = vmatpush1.bf16.msra.mxu0 %v875
    %973 = vmatprep.subr.bf16.mxu0 %v878
    %974 = vmatpush1.bf16.msra.mxu0 %v877
    %975 = vmatprep.subr.bf16.mxu0 %v880
    %976 = vmatpush1.bf16.msra.mxu0 %v879
    %977 = vmatprep.subr.bf16.mxu0 %v882
    %978 = vmatpush1.bf16.msra.mxu0 %v881
    %979 = vmatprep.subr.bf16.mxu0 %v884
    %980 = vmatpush1.bf16.msra.mxu0 %v883
    %981 = vmatprep.mubr.bf16.mxu0 %v686
    %982 = vmatmul.mubr.bf16.gmra.mrb[0].mxu0 %v685
    %v983 = vpop.f32.mrb[0].mxu0
    %v984 = vadd.f32 0.0, %v983
    %v985 = vpop.f32.mrb[0].mxu0
    %v986 = vadd.f32 0.0, %v985
    %v987 = vpop.f32.mrb[0].mxu0
    %v988 = vadd.f32 0.0, %v987
    %v989 = vpop.f32.mrb[0].mxu0
    %v990 = vadd.f32 0.0, %v989
    %991 = vmatprep.mubr.bf16.mxu0 %v689
    %992 = vmatmul.mubr.bf16.gmra.mrb[0].mxu0 %v688
    %v993 = vpop.f32.mrb[0].mxu0
    %v994 = vadd.f32 0.0, %v993
    %v995 = vpop.f32.mrb[0].mxu0
    %v996 = vadd.f32 0.0, %v995
    %v997 = vpop.f32.mrb[0].mxu0
    %v998 = vadd.f32 0.0, %v997
    %v999 = vpop.f32.mrb[0].mxu0
    %v1000 = vadd.f32 0.0, %v999
    %1001 = vmatprep.mubr.bf16.mxu0 %v692
    %1002 = vmatmul.mubr.bf16.gmra.mrb[0].mxu0 %v691
    %v1003 = vpop.f32.mrb[0].mxu0
    %v1004 = vadd.f32 0.0, %v1003
    %v1005 = vpop.f32.mrb[0].mxu0
    %v1006 = vadd.f32 0.0, %v1005
    %v1007 = vpop.f32.mrb[0].mxu0
    %v1008 = vadd.f32 0.0, %v1007
    %v1009 = vpop.f32.mrb[0].mxu0
    %v1010 = vadd.f32 0.0, %v1009
    %1011 = vmatprep.mubr.bf16.mxu0 %v695
    %1012 = vmatmul.mubr.bf16.gmra.mrb[0].mxu0 %v694
    %v1013 = vpop.f32.mrb[0].mxu0
    %v1014 = vadd.f32 0.0, %v1013
    %v1015 = vpop.f32.mrb[0].mxu0
    %v1016 = vadd.f32 0.0, %v1015
    %v1017 = vpop.f32.mrb[0].mxu0
    %v1018 = vadd.f32 0.0, %v1017
    %v1019 = vpop.f32.mrb[0].mxu0
    %v1020 = vadd.f32 0.0, %v1019
    %1021 = vdwg.mxu0
    %1022 = vmatprep.subr.bf16.mxu0 %v886
    %1023 = vmatpush1.bf16.msra.mxu0 %v885
    %1024 = vmatprep.subr.bf16.mxu0 %v888
    %1025 = vmatpush1.bf16.msra.mxu0 %v887
    %1026 = vmatprep.subr.bf16.mxu0 %v890
    %1027 = vmatpush1.bf16.msra.mxu0 %v889
    %1028 = vmatprep.subr.bf16.mxu0 %v892
    %1029 = vmatpush1.bf16.msra.mxu0 %v891
    %1030 = vmatprep.subr.bf16.mxu0 %v894
    %1031 = vmatpush1.bf16.msra.mxu0 %v893
    %1032 = vmatprep.subr.bf16.mxu0 %v896
    %1033 = vmatpush1.bf16.msra.mxu0 %v895
    %1034 = vmatprep.subr.bf16.mxu0 %v898
    %1035 = vmatpush1.bf16.msra.mxu0 %v897
    %1036 = vmatprep.subr.bf16.mxu0 %v900
    %1037 = vmatpush1.bf16.msra.mxu0 %v899
    %1038 = vmatprep.subr.bf16.mxu0 0
    %1039 = vmatpush1.bf16.msra.mxu0 0
    %1040 = vmatprep.subr.bf16.mxu0 0
    %1041 = vmatpush1.bf16.msra.mxu0 0
    %1042 = vmatprep.subr.bf16.mxu0 0
    %1043 = vmatpush1.bf16.msra.mxu0 0
    %1044 = vmatprep.subr.bf16.mxu0 0
    %1045 = vmatpush1.bf16.msra.mxu0 0
    %1046 = vmatprep.subr.bf16.mxu0 0
    %1047 = vmatpush1.bf16.msra.mxu0 0
    %1048 = vmatprep.subr.bf16.mxu0 0
    %1049 = vmatpush1.bf16.msra.mxu0 0
    %1050 = vmatprep.subr.bf16.mxu0 0
    %1051 = vmatpush1.bf16.msra.mxu0 0
    %1052 = vmatprep.subr.bf16.mxu0 0
    %1053 = vmatpush1.bf16.msra.mxu0 0
    %1054 = vmatprep.mubr.bf16.mxu0 0
    %1055 = vmatmul.mubr.bf16.gmra.mrb[0].mxu0 %v687
    %v1056 = vpop.f32.mrb[0].mxu0
    %v1057 = vadd.f32 %v984, %v1056
    %v1058 = vpop.f32.mrb[0].mxu0
    %v1059 = vadd.f32 %v986, %v1058
    %v1060 = vpop.f32.mrb[0].mxu0
    %v1061 = vadd.f32 %v988, %v1060
    %v1062 = vpop.f32.mrb[0].mxu0
    %v1063 = vadd.f32 %v990, %v1062
    %1064 = vmatprep.mubr.bf16.mxu0 0
    %1065 = vmatmul.mubr.bf16.gmra.mrb[0].mxu0 %v690
    %v1066 = vpop.f32.mrb[0].mxu0
    %v1067 = vadd.f32 %v994, %v1066
    %v1068 = vpop.f32.mrb[0].mxu0
    %v1069 = vadd.f32 %v996, %v1068
    %v1070 = vpop.f32.mrb[0].mxu0
    %v1071 = vadd.f32 %v998, %v1070
    %v1072 = vpop.f32.mrb[0].mxu0
    %v1073 = vadd.f32 %v1000, %v1072
    %1074 = vmatprep.mubr.bf16.mxu0 0
    %1075 = vmatmul.mubr.bf16.gmra.mrb[0].mxu0 %v693
    %v1076 = vpop.f32.mrb[0].mxu0
    %v1077 = vadd.f32 %v1004, %v1076
    %v1078 = vpop.f32.mrb[0].mxu0
    %v1079 = vadd.f32 %v1006, %v1078
    %v1080 = vpop.f32.mrb[0].mxu0
    %v1081 = vadd.f32 %v1008, %v1080
    %v1082 = vpop.f32.mrb[0].mxu0
    %v1083 = vadd.f32 %v1010, %v1082
    %1084 = vmatprep.mubr.bf16.mxu0 0
    %1085 = vmatmul.mubr.bf16.gmra.mrb[0].mxu0 %v696
    %v1086 = vpop.f32.mrb[0].mxu0
    %v1087 = vadd.f32 %v1014, %v1086
    %v1088 = vpop.f32.mrb[0].mxu0
    %v1089 = vadd.f32 %v1016, %v1088
    %v1090 = vpop.f32.mrb[0].mxu0
    %v1091 = vadd.f32 %v1018, %v1090
    %v1092 = vpop.f32.mrb[0].mxu0
    %v1093 = vadd.f32 %v1020, %v1092
    %1094 = vdwg.mxu0
    %v1095 = vpack.c.bf16 %v554, %v551
    %v1096 = vpack.c.bf16 %v562, %v559
    %v1097 = vpack.c.bf16 %v570, %v567
    %v1098 = vpack.c.bf16 %v578, %v575
    %v1099 = vld [vmem:[#allocation8] sm:$0xff]
    %v1100 = vld [vmem:[#allocation8 + $0x8] sm:$0xff]
    %v1101 = vld [vmem:[#allocation8 + $0x10] sm:$0xff]
    %v1102 = vld [vmem:[#allocation8 + $0x18] sm:$0xff]
    %v1103 = vld [vmem:[#allocation8 + $0x20] sm:$0xff]
    %v1104 = vld [vmem:[#allocation8 + $0x28] sm:$0xff]
    %v1105 = vld [vmem:[#allocation8 + $0x30] sm:$0xff]
    %v1106 = vld [vmem:[#allocation8 + $0x38] sm:$0xff]
    %v1107 = vld [vmem:[#allocation8 + $0x40] sm:$0xff]
    %v1108 = vld [vmem:[#allocation8 + $0x48] sm:$0xff]
    %v1109 = vld [vmem:[#allocation8 + $0x50] sm:$0xff]
    %v1110 = vld [vmem:[#allocation8 + $0x58] sm:$0xff]
    %v1111 = vld [vmem:[#allocation8 + $0x60] sm:$0xff]
    %v1112 = vld [vmem:[#allocation8 + $0x68] sm:$0xff]
    %v1113 = vld [vmem:[#allocation8 + $0x70] sm:$0xff]
    %v1114 = vld [vmem:[#allocation8 + $0x78] sm:$0xff]
    %v1115 = vld [vmem:[#allocation8 + $0x80] sm:$0xff]
    %v1116 = vld [vmem:[#allocation8 + $0x88] sm:$0xff]
    %v1117 = vld [vmem:[#allocation8 + $0x90] sm:$0xff]
    %v1118 = vld [vmem:[#allocation8 + $0x98] sm:$0xff]
    %v1119 = vld [vmem:[#allocation8 + $0xa0] sm:$0xff]
    %v1120 = vld [vmem:[#allocation8 + $0xa8] sm:$0xff]
    %v1121 = vld [vmem:[#allocation8 + $0xb0] sm:$0xff]
    %v1122 = vld [vmem:[#allocation8 + $0xb8] sm:$0xff]
    %v1123 = vld [vmem:[#allocation8 + $0xc0] sm:$0xff]
    %v1124 = vld [vmem:[#allocation8 + $0xc8] sm:$0xff]
    %v1125 = vld [vmem:[#allocation8 + $0xd0] sm:$0xff]
    %v1126 = vld [vmem:[#allocation8 + $0xd8] sm:$0xff]
    %v1127 = vld [vmem:[#allocation8 + $0xe0] sm:$0xff]
    %v1128 = vld [vmem:[#allocation8 + $0xe8] sm:$0xff]
    %v1129 = vld [vmem:[#allocation8 + $0xf0] sm:$0xff]
    %v1130 = vld [vmem:[#allocation8 + $0xf8] sm:$0xff]
    %v1131 = vpack.c.bf16 %v1061, %v1057
    %v1132 = vpack.c.bf16 %v1063, %v1059
    %v1133 = vpack.c.bf16 %v1071, %v1067
    %v1134 = vpack.c.bf16 %v1073, %v1069
    %v1135 = vpack.c.bf16 %v1081, %v1077
    %v1136 = vpack.c.bf16 %v1083, %v1079
    %v1137 = vpack.c.bf16 %v1091, %v1087
    %v1138 = vpack.c.bf16 %v1093, %v1089
    %v1139 = vld [vmem:[#allocation10] sm:$0xff]
    %v1140 = vld [vmem:[#allocation10 + $0x8] sm:$0xff]
    %v1141 = vld [vmem:[#allocation10 + $0x10] sm:$0xff]
    %v1142 = vld [vmem:[#allocation10 + $0x18] sm:$0xff]
    %v1143 = vld [vmem:[#allocation10 + $0x20] sm:$0xff]
    %v1144 = vld [vmem:[#allocation10 + $0x28] sm:$0xff]
    %v1145 = vld [vmem:[#allocation10 + $0x30] sm:$0xff]
    %v1146 = vld [vmem:[#allocation10 + $0x38] sm:$0xff]
    %v1147 = vld [vmem:[#allocation10 + $0x40] sm:$0xff]
    %v1148 = vld [vmem:[#allocation10 + $0x48] sm:$0xff]
    %v1149 = vld [vmem:[#allocation10 + $0x50] sm:$0xff]
    %v1150 = vld [vmem:[#allocation10 + $0x58] sm:$0xff]
    %v1151 = vld [vmem:[#allocation10 + $0x60] sm:$0xff]
    %v1152 = vld [vmem:[#allocation10 + $0x68] sm:$0xff]
    %v1153 = vld [vmem:[#allocation10 + $0x70] sm:$0xff]
    %v1154 = vld [vmem:[#allocation10 + $0x78] sm:$0xff]
    %v1155 = vld [vmem:[#allocation10 + $0x80] sm:$0xff]
    %v1156 = vld [vmem:[#allocation10 + $0x88] sm:$0xff]
    %v1157 = vld [vmem:[#allocation10 + $0x90] sm:$0xff]
    %v1158 = vld [vmem:[#allocation10 + $0x98] sm:$0xff]
    %v1159 = vld [vmem:[#allocation10 + $0xa0] sm:$0xff]
    %v1160 = vld [vmem:[#allocation10 + $0xa8] sm:$0xff]
    %v1161 = vld [vmem:[#allocation10 + $0xb0] sm:$0xff]
    %v1162 = vld [vmem:[#allocation10 + $0xb8] sm:$0xff]
    %v1163 = vld [vmem:[#allocation10 + $0xc0] sm:$0xff]
    %v1164 = vld [vmem:[#allocation10 + $0xc8] sm:$0xff]
    %v1165 = vld [vmem:[#allocation10 + $0xd0] sm:$0xff]
    %v1166 = vld [vmem:[#allocation10 + $0xd8] sm:$0xff]
    %v1167 = vld [vmem:[#allocation10 + $0xe0] sm:$0xff]
    %v1168 = vld [vmem:[#allocation10 + $0xe8] sm:$0xff]
    %v1169 = vld [vmem:[#allocation10 + $0xf0] sm:$0xff]
    %v1170 = vld [vmem:[#allocation10 + $0xf8] sm:$0xff]
    %v1171 = vld [vmem:[#allocation10 + $0x100] sm:$0xff]
    %v1172 = vld [vmem:[#allocation10 + $0x108] sm:$0xff]
    %v1173 = vld [vmem:[#allocation10 + $0x110] sm:$0xff]
    %v1174 = vld [vmem:[#allocation10 + $0x118] sm:$0xff]
    %v1175 = vld [vmem:[#allocation10 + $0x120] sm:$0xff]
    %v1176 = vld [vmem:[#allocation10 + $0x128] sm:$0xff]
    %v1177 = vld [vmem:[#allocation10 + $0x130] sm:$0xff]
    %v1178 = vld [vmem:[#allocation10 + $0x138] sm:$0xff]
    %v1179 = vld [vmem:[#allocation10 + $0x140] sm:$0xff]
    %v1180 = vld [vmem:[#allocation10 + $0x148] sm:$0xff]
    %v1181 = vld [vmem:[#allocation10 + $0x150] sm:$0xff]
    %v1182 = vld [vmem:[#allocation10 + $0x158] sm:$0xff]
    %v1183 = vld [vmem:[#allocation10 + $0x160] sm:$0xff]
    %v1184 = vld [vmem:[#allocation10 + $0x168] sm:$0xff]
    %v1185 = vld [vmem:[#allocation10 + $0x170] sm:$0xff]
    %v1186 = vld [vmem:[#allocation10 + $0x178] sm:$0xff]
    %v1187 = vld [vmem:[#allocation10 + $0x180] sm:$0xff]
    %v1188 = vld [vmem:[#allocation10 + $0x188] sm:$0xff]
    %v1189 = vld [vmem:[#allocation10 + $0x190] sm:$0xff]
    %v1190 = vld [vmem:[#allocation10 + $0x198] sm:$0xff]
    %v1191 = vld [vmem:[#allocation10 + $0x1a0] sm:$0xff]
    %v1192 = vld [vmem:[#allocation10 + $0x1a8] sm:$0xff]
    %v1193 = vld [vmem:[#allocation10 + $0x1b0] sm:$0xff]
    %v1194 = vld [vmem:[#allocation10 + $0x1b8] sm:$0xff]
    %v1195 = vld [vmem:[#allocation10 + $0x1c0] sm:$0xff]
    %v1196 = vld [vmem:[#allocation10 + $0x1c8] sm:$0xff]
    %v1197 = vld [vmem:[#allocation10 + $0x1d0] sm:$0xff]
    %v1198 = vld [vmem:[#allocation10 + $0x1d8] sm:$0xff]
    %v1199 = vld [vmem:[#allocation10 + $0x1e0] sm:$0xff]
    %v1200 = vld [vmem:[#allocation10 + $0x1e8] sm:$0xff]
    %v1201 = vld [vmem:[#allocation10 + $0x1f0] sm:$0xff]
    %v1202 = vld [vmem:[#allocation10 + $0x1f8] sm:$0xff]
    %v1203 = vld [vmem:[#allocation10 + $0x200] sm:$0xff]
    %v1204 = vld [vmem:[#allocation10 + $0x208] sm:$0xff]
    %v1205 = vld [vmem:[#allocation10 + $0x210] sm:$0xff]
    %v1206 = vld [vmem:[#allocation10 + $0x218] sm:$0xff]
    %v1207 = vld [vmem:[#allocation10 + $0x220] sm:$0xff]
    %v1208 = vld [vmem:[#allocation10 + $0x228] sm:$0xff]
    %v1209 = vld [vmem:[#allocation10 + $0x230] sm:$0xff]
    %v1210 = vld [vmem:[#allocation10 + $0x238] sm:$0xff]
    %v1211 = vld [vmem:[#allocation10 + $0x240] sm:$0xff]
    %v1212 = vld [vmem:[#allocation10 + $0x248] sm:$0xff]
    %v1213 = vld [vmem:[#allocation10 + $0x250] sm:$0xff]
    %v1214 = vld [vmem:[#allocation10 + $0x258] sm:$0xff]
    %v1215 = vld [vmem:[#allocation10 + $0x260] sm:$0xff]
    %v1216 = vld [vmem:[#allocation10 + $0x268] sm:$0xff]
    %v1217 = vld [vmem:[#allocation10 + $0x270] sm:$0xff]
    %v1218 = vld [vmem:[#allocation10 + $0x278] sm:$0xff]
    %v1219 = vld [vmem:[#allocation10 + $0x280] sm:$0xff]
    %v1220 = vld [vmem:[#allocation10 + $0x288] sm:$0xff]
    %v1221 = vld [vmem:[#allocation10 + $0x290] sm:$0xff]
    %v1222 = vld [vmem:[#allocation10 + $0x298] sm:$0xff]
    %v1223 = vld [vmem:[#allocation10 + $0x2a0] sm:$0xff]
    %v1224 = vld [vmem:[#allocation10 + $0x2a8] sm:$0xff]
    %v1225 = vld [vmem:[#allocation10 + $0x2b0] sm:$0xff]
    %v1226 = vld [vmem:[#allocation10 + $0x2b8] sm:$0xff]
    %v1227 = vld [vmem:[#allocation10 + $0x2c0] sm:$0xff]
    %v1228 = vld [vmem:[#allocation10 + $0x2c8] sm:$0xff]
    %v1229 = vld [vmem:[#allocation10 + $0x2d0] sm:$0xff]
    %v1230 = vld [vmem:[#allocation10 + $0x2d8] sm:$0xff]
    %v1231 = vld [vmem:[#allocation10 + $0x2e0] sm:$0xff]
    %v1232 = vld [vmem:[#allocation10 + $0x2e8] sm:$0xff]
    %v1233 = vld [vmem:[#allocation10 + $0x2f0] sm:$0xff]
    %v1234 = vld [vmem:[#allocation10 + $0x2f8] sm:$0xff]
    %v1235 = vld [vmem:[#allocation10 + $0x300] sm:$0xff]
    %v1236 = vld [vmem:[#allocation10 + $0x308] sm:$0xff]
    %v1237 = vld [vmem:[#allocation10 + $0x310] sm:$0xff]
    %v1238 = vld [vmem:[#allocation10 + $0x318] sm:$0xff]
    %v1239 = vld [vmem:[#allocation10 + $0x320] sm:$0xff]
    %v1240 = vld [vmem:[#allocation10 + $0x328] sm:$0xff]
    %v1241 = vld [vmem:[#allocation10 + $0x330] sm:$0xff]
    %v1242 = vld [vmem:[#allocation10 + $0x338] sm:$0xff]
    %v1243 = vld [vmem:[#allocation10 + $0x340] sm:$0xff]
    %v1244 = vld [vmem:[#allocation10 + $0x348] sm:$0xff]
    %v1245 = vld [vmem:[#allocation10 + $0x350] sm:$0xff]
    %v1246 = vld [vmem:[#allocation10 + $0x358] sm:$0xff]
    %v1247 = vld [vmem:[#allocation10 + $0x360] sm:$0xff]
    %v1248 = vld [vmem:[#allocation10 + $0x368] sm:$0xff]
    %v1249 = vld [vmem:[#allocation10 + $0x370] sm:$0xff]
    %v1250 = vld [vmem:[#allocation10 + $0x378] sm:$0xff]
    %v1251 = vld [vmem:[#allocation10 + $0x380] sm:$0xff]
    %v1252 = vld [vmem:[#allocation10 + $0x388] sm:$0xff]
    %v1253 = vld [vmem:[#allocation10 + $0x390] sm:$0xff]
    %v1254 = vld [vmem:[#allocation10 + $0x398] sm:$0xff]
    %v1255 = vld [vmem:[#allocation10 + $0x3a0] sm:$0xff]
    %v1256 = vld [vmem:[#allocation10 + $0x3a8] sm:$0xff]
    %v1257 = vld [vmem:[#allocation10 + $0x3b0] sm:$0xff]
    %v1258 = vld [vmem:[#allocation10 + $0x3b8] sm:$0xff]
    %v1259 = vld [vmem:[#allocation10 + $0x3c0] sm:$0xff]
    %v1260 = vld [vmem:[#allocation10 + $0x3c8] sm:$0xff]
    %v1261 = vld [vmem:[#allocation10 + $0x3d0] sm:$0xff]
    %v1262 = vld [vmem:[#allocation10 + $0x3d8] sm:$0xff]
    %v1263 = vld [vmem:[#allocation10 + $0x3e0] sm:$0xff]
    %v1264 = vld [vmem:[#allocation10 + $0x3e8] sm:$0xff]
    %v1265 = vld [vmem:[#allocation10 + $0x3f0] sm:$0xff]
    %v1266 = vld [vmem:[#allocation10 + $0x3f8] sm:$0xff]
    %v1395 = vunpack.c.l.b16 %v1139
    %v1396 = vunpack.c.h.b16 %v1139
    %v1397 = vunpack.c.l.b16 %v1140
    %v1398 = vunpack.c.h.b16 %v1140
    %v1399 = vunpack.c.l.b16 %v1141
    %v1400 = vunpack.c.h.b16 %v1141
    %v1401 = vunpack.c.l.b16 %v1142
    %v1402 = vunpack.c.h.b16 %v1142
    %v1403 = vunpack.c.l.b16 %v1143
    %v1404 = vunpack.c.h.b16 %v1143
    %v1405 = vunpack.c.l.b16 %v1144
    %v1406 = vunpack.c.h.b16 %v1144
    %v1407 = vunpack.c.l.b16 %v1145
    %v1408 = vunpack.c.h.b16 %v1145
    %v1409 = vunpack.c.l.b16 %v1146
    %v1410 = vunpack.c.h.b16 %v1146
    %v1411 = vunpack.c.l.b16 %v1147
    %v1412 = vunpack.c.h.b16 %v1147
    %v1413 = vunpack.c.l.b16 %v1148
    %v1414 = vunpack.c.h.b16 %v1148
    %v1415 = vunpack.c.l.b16 %v1149
    %v1416 = vunpack.c.h.b16 %v1149
    %v1417 = vunpack.c.l.b16 %v1150
    %v1418 = vunpack.c.h.b16 %v1150
    %v1419 = vunpack.c.l.b16 %v1151
    %v1420 = vunpack.c.h.b16 %v1151
    %v1421 = vunpack.c.l.b16 %v1152
    %v1422 = vunpack.c.h.b16 %v1152
    %v1423 = vunpack.c.l.b16 %v1153
    %v1424 = vunpack.c.h.b16 %v1153
    %v1425 = vunpack.c.l.b16 %v1154
    %v1426 = vunpack.c.h.b16 %v1154
    %v1427 = vunpack.c.l.b16 %v1155
    %v1428 = vunpack.c.h.b16 %v1155
    %v1429 = vunpack.c.l.b16 %v1156
    %v1430 = vunpack.c.h.b16 %v1156
    %v1431 = vunpack.c.l.b16 %v1157
    %v1432 = vunpack.c.h.b16 %v1157
    %v1433 = vunpack.c.l.b16 %v1158
    %v1434 = vunpack.c.h.b16 %v1158
    %v1435 = vunpack.c.l.b16 %v1159
    %v1436 = vunpack.c.h.b16 %v1159
    %v1437 = vunpack.c.l.b16 %v1160
    %v1438 = vunpack.c.h.b16 %v1160
    %v1439 = vunpack.c.l.b16 %v1161
    %v1440 = vunpack.c.h.b16 %v1161
    %v1441 = vunpack.c.l.b16 %v1162
    %v1442 = vunpack.c.h.b16 %v1162
    %v1443 = vunpack.c.l.b16 %v1163
    %v1444 = vunpack.c.h.b16 %v1163
    %v1445 = vunpack.c.l.b16 %v1164
    %v1446 = vunpack.c.h.b16 %v1164
    %v1447 = vunpack.c.l.b16 %v1165
    %v1448 = vunpack.c.h.b16 %v1165
    %v1449 = vunpack.c.l.b16 %v1166
    %v1450 = vunpack.c.h.b16 %v1166
    %v1451 = vunpack.c.l.b16 %v1167
    %v1452 = vunpack.c.h.b16 %v1167
    %v1453 = vunpack.c.l.b16 %v1168
    %v1454 = vunpack.c.h.b16 %v1168
    %v1455 = vunpack.c.l.b16 %v1169
    %v1456 = vunpack.c.h.b16 %v1169
    %v1457 = vunpack.c.l.b16 %v1170
    %v1458 = vunpack.c.h.b16 %v1170
    %v1459 = vunpack.c.l.b16 %v1171
    %v1460 = vunpack.c.h.b16 %v1171
    %v1461 = vunpack.c.l.b16 %v1172
    %v1462 = vunpack.c.h.b16 %v1172
    %v1463 = vunpack.c.l.b16 %v1173
    %v1464 = vunpack.c.h.b16 %v1173
    %v1465 = vunpack.c.l.b16 %v1174
    %v1466 = vunpack.c.h.b16 %v1174
    %v1467 = vunpack.c.l.b16 %v1175
    %v1468 = vunpack.c.h.b16 %v1175
    %v1469 = vunpack.c.l.b16 %v1176
    %v1470 = vunpack.c.h.b16 %v1176
    %v1471 = vunpack.c.l.b16 %v1177
    %v1472 = vunpack.c.h.b16 %v1177
    %v1473 = vunpack.c.l.b16 %v1178
    %v1474 = vunpack.c.h.b16 %v1178
    %v1475 = vunpack.c.l.b16 %v1179
    %v1476 = vunpack.c.h.b16 %v1179
    %v1477 = vunpack.c.l.b16 %v1180
    %v1478 = vunpack.c.h.b16 %v1180
    %v1479 = vunpack.c.l.b16 %v1181
    %v1480 = vunpack.c.h.b16 %v1181
    %v1481 = vunpack.c.l.b16 %v1182
    %v1482 = vunpack.c.h.b16 %v1182
    %v1483 = vunpack.c.l.b16 %v1183
    %v1484 = vunpack.c.h.b16 %v1183
    %v1485 = vunpack.c.l.b16 %v1184
    %v1486 = vunpack.c.h.b16 %v1184
    %v1487 = vunpack.c.l.b16 %v1185
    %v1488 = vunpack.c.h.b16 %v1185
    %v1489 = vunpack.c.l.b16 %v1186
    %v1490 = vunpack.c.h.b16 %v1186
    %v1491 = vunpack.c.l.b16 %v1187
    %v1492 = vunpack.c.h.b16 %v1187
    %v1493 = vunpack.c.l.b16 %v1188
    %v1494 = vunpack.c.h.b16 %v1188
    %v1495 = vunpack.c.l.b16 %v1189
    %v1496 = vunpack.c.h.b16 %v1189
    %v1497 = vunpack.c.l.b16 %v1190
    %v1498 = vunpack.c.h.b16 %v1190
    %v1499 = vunpack.c.l.b16 %v1191
    %v1500 = vunpack.c.h.b16 %v1191
    %v1501 = vunpack.c.l.b16 %v1192
    %v1502 = vunpack.c.h.b16 %v1192
    %v1503 = vunpack.c.l.b16 %v1193
    %v1504 = vunpack.c.h.b16 %v1193
    %v1505 = vunpack.c.l.b16 %v1194
    %v1506 = vunpack.c.h.b16 %v1194
    %v1507 = vunpack.c.l.b16 %v1195
    %v1508 = vunpack.c.h.b16 %v1195
    %v1509 = vunpack.c.l.b16 %v1196
    %v1510 = vunpack.c.h.b16 %v1196
    %v1511 = vunpack.c.l.b16 %v1197
    %v1512 = vunpack.c.h.b16 %v1197
    %v1513 = vunpack.c.l.b16 %v1198
    %v1514 = vunpack.c.h.b16 %v1198
    %v1515 = vunpack.c.l.b16 %v1199
    %v1516 = vunpack.c.h.b16 %v1199
    %v1517 = vunpack.c.l.b16 %v1200
    %v1518 = vunpack.c.h.b16 %v1200
    %v1519 = vunpack.c.l.b16 %v1201
    %v1520 = vunpack.c.h.b16 %v1201
    %v1521 = vunpack.c.l.b16 %v1202
    %v1522 = vunpack.c.h.b16 %v1202
    %v1523 = vunpack.c.l.b16 %v1203
    %v1524 = vunpack.c.h.b16 %v1203
    %v1525 = vunpack.c.l.b16 %v1204
    %v1526 = vunpack.c.h.b16 %v1204
    %v1527 = vunpack.c.l.b16 %v1205
    %v1528 = vunpack.c.h.b16 %v1205
    %v1529 = vunpack.c.l.b16 %v1206
    %v1530 = vunpack.c.h.b16 %v1206
    %v1531 = vunpack.c.l.b16 %v1207
    %v1532 = vunpack.c.h.b16 %v1207
    %v1533 = vunpack.c.l.b16 %v1208
    %v1534 = vunpack.c.h.b16 %v1208
    %v1535 = vunpack.c.l.b16 %v1209
    %v1536 = vunpack.c.h.b16 %v1209
    %v1537 = vunpack.c.l.b16 %v1210
    %v1538 = vunpack.c.h.b16 %v1210
    %v1539 = vunpack.c.l.b16 %v1211
    %v1540 = vunpack.c.h.b16 %v1211
    %v1541 = vunpack.c.l.b16 %v1212
    %v1542 = vunpack.c.h.b16 %v1212
    %v1543 = vunpack.c.l.b16 %v1213
    %v1544 = vunpack.c.h.b16 %v1213
    %v1545 = vunpack.c.l.b16 %v1214
    %v1546 = vunpack.c.h.b16 %v1214
    %v1547 = vunpack.c.l.b16 %v1215
    %v1548 = vunpack.c.h.b16 %v1215
    %v1549 = vunpack.c.l.b16 %v1216
    %v1550 = vunpack.c.h.b16 %v1216
    %v1551 = vunpack.c.l.b16 %v1217
    %v1552 = vunpack.c.h.b16 %v1217
    %v1553 = vunpack.c.l.b16 %v1218
    %v1554 = vunpack.c.h.b16 %v1218
    %v1555 = vunpack.c.l.b16 %v1219
    %v1556 = vunpack.c.h.b16 %v1219
    %v1557 = vunpack.c.l.b16 %v1220
    %v1558 = vunpack.c.h.b16 %v1220
    %v1559 = vunpack.c.l.b16 %v1221
    %v1560 = vunpack.c.h.b16 %v1221
    %v1561 = vunpack.c.l.b16 %v1222
    %v1562 = vunpack.c.h.b16 %v1222
    %v1563 = vunpack.c.l.b16 %v1223
    %v1564 = vunpack.c.h.b16 %v1223
    %v1565 = vunpack.c.l.b16 %v1224
    %v1566 = vunpack.c.h.b16 %v1224
    %v1567 = vunpack.c.l.b16 %v1225
    %v1568 = vunpack.c.h.b16 %v1225
    %v1569 = vunpack.c.l.b16 %v1226
    %v1570 = vunpack.c.h.b16 %v1226
    %v1571 = vunpack.c.l.b16 %v1227
    %v1572 = vunpack.c.h.b16 %v1227
    %v1573 = vunpack.c.l.b16 %v1228
    %v1574 = vunpack.c.h.b16 %v1228
    %v1575 = vunpack.c.l.b16 %v1229
    %v1576 = vunpack.c.h.b16 %v1229
    %v1577 = vunpack.c.l.b16 %v1230
    %v1578 = vunpack.c.h.b16 %v1230
    %v1579 = vunpack.c.l.b16 %v1231
    %v1580 = vunpack.c.h.b16 %v1231
    %v1581 = vunpack.c.l.b16 %v1232
    %v1582 = vunpack.c.h.b16 %v1232
    %v1583 = vunpack.c.l.b16 %v1233
    %v1584 = vunpack.c.h.b16 %v1233
    %v1585 = vunpack.c.l.b16 %v1234
    %v1586 = vunpack.c.h.b16 %v1234
    %v1587 = vunpack.c.l.b16 %v1235
    %v1588 = vunpack.c.h.b16 %v1235
    %v1589 = vunpack.c.l.b16 %v1236
    %v1590 = vunpack.c.h.b16 %v1236
    %v1591 = vunpack.c.l.b16 %v1237
    %v1592 = vunpack.c.h.b16 %v1237
    %v1593 = vunpack.c.l.b16 %v1238
    %v1594 = vunpack.c.h.b16 %v1238
    %v1595 = vunpack.c.l.b16 %v1239
    %v1596 = vunpack.c.h.b16 %v1239
    %v1597 = vunpack.c.l.b16 %v1240
    %v1598 = vunpack.c.h.b16 %v1240
    %v1599 = vunpack.c.l.b16 %v1241
    %v1600 = vunpack.c.h.b16 %v1241
    %v1601 = vunpack.c.l.b16 %v1242
    %v1602 = vunpack.c.h.b16 %v1242
    %v1603 = vunpack.c.l.b16 %v1243
    %v1604 = vunpack.c.h.b16 %v1243
    %v1605 = vunpack.c.l.b16 %v1244
    %v1606 = vunpack.c.h.b16 %v1244
    %v1607 = vunpack.c.l.b16 %v1245
    %v1608 = vunpack.c.h.b16 %v1245
    %v1609 = vunpack.c.l.b16 %v1246
    %v1610 = vunpack.c.h.b16 %v1246
    %v1611 = vunpack.c.l.b16 %v1247
    %v1612 = vunpack.c.h.b16 %v1247
    %v1613 = vunpack.c.l.b16 %v1248
    %v1614 = vunpack.c.h.b16 %v1248
    %v1615 = vunpack.c.l.b16 %v1249
    %v1616 = vunpack.c.h.b16 %v1249
    %v1617 = vunpack.c.l.b16 %v1250
    %v1618 = vunpack.c.h.b16 %v1250
    %v1619 = vunpack.c.l.b16 %v1251
    %v1620 = vunpack.c.h.b16 %v1251
    %v1621 = vunpack.c.l.b16 %v1252
    %v1622 = vunpack.c.h.b16 %v1252
    %v1623 = vunpack.c.l.b16 %v1253
    %v1624 = vunpack.c.h.b16 %v1253
    %v1625 = vunpack.c.l.b16 %v1254
    %v1626 = vunpack.c.h.b16 %v1254
    %v1627 = vunpack.c.l.b16 %v1255
    %v1628 = vunpack.c.h.b16 %v1255
    %v1629 = vunpack.c.l.b16 %v1256
    %v1630 = vunpack.c.h.b16 %v1256
    %v1631 = vunpack.c.l.b16 %v1257
    %v1632 = vunpack.c.h.b16 %v1257
    %v1633 = vunpack.c.l.b16 %v1258
    %v1634 = vunpack.c.h.b16 %v1258
    %v1635 = vunpack.c.l.b16 %v1259
    %v1636 = vunpack.c.h.b16 %v1259
    %v1637 = vunpack.c.l.b16 %v1260
    %v1638 = vunpack.c.h.b16 %v1260
    %v1639 = vunpack.c.l.b16 %v1261
    %v1640 = vunpack.c.h.b16 %v1261
    %v1641 = vunpack.c.l.b16 %v1262
    %v1642 = vunpack.c.h.b16 %v1262
    %v1643 = vunpack.c.l.b16 %v1263
    %v1644 = vunpack.c.h.b16 %v1263
    %v1645 = vunpack.c.l.b16 %v1264
    %v1646 = vunpack.c.h.b16 %v1264
    %v1647 = vunpack.c.l.b16 %v1265
    %v1648 = vunpack.c.h.b16 %v1265
    %v1649 = vunpack.c.l.b16 %v1266
    %v1650 = vunpack.c.h.b16 %v1266
    %v1651 = vpack.c.b16 %v1403, %v1395
    %v1652 = vpack.c.b16 %v1404, %v1396
    %v1653 = vpack.c.b16 %v1405, %v1397
    %v1654 = vpack.c.b16 %v1406, %v1398
    %v1655 = vpack.c.b16 %v1407, %v1399
    %v1656 = vpack.c.b16 %v1408, %v1400
    %v1657 = vpack.c.b16 %v1409, %v1401
    %v1658 = vpack.c.b16 %v1410, %v1402
    %v1659 = vpack.c.b16 %v1419, %v1411
    %v1660 = vpack.c.b16 %v1420, %v1412
    %v1661 = vpack.c.b16 %v1421, %v1413
    %v1662 = vpack.c.b16 %v1422, %v1414
    %v1663 = vpack.c.b16 %v1423, %v1415
    %v1664 = vpack.c.b16 %v1424, %v1416
    %v1665 = vpack.c.b16 %v1425, %v1417
    %v1666 = vpack.c.b16 %v1426, %v1418
    %v1667 = vpack.c.b16 %v1435, %v1427
    %v1668 = vpack.c.b16 %v1436, %v1428
    %v1669 = vpack.c.b16 %v1437, %v1429
    %v1670 = vpack.c.b16 %v1438, %v1430
    %v1671 = vpack.c.b16 %v1439, %v1431
    %v1672 = vpack.c.b16 %v1440, %v1432
    %v1673 = vpack.c.b16 %v1441, %v1433
    %v1674 = vpack.c.b16 %v1442, %v1434
    %v1675 = vpack.c.b16 %v1451, %v1443
    %v1676 = vpack.c.b16 %v1452, %v1444
    %v1677 = vpack.c.b16 %v1453, %v1445
    %v1678 = vpack.c.b16 %v1454, %v1446
    %v1679 = vpack.c.b16 %v1455, %v1447
    %v1680 = vpack.c.b16 %v1456, %v1448
    %v1681 = vpack.c.b16 %v1457, %v1449
    %v1682 = vpack.c.b16 %v1458, %v1450
    %v1683 = vpack.c.b16 %v1467, %v1459
    %v1684 = vpack.c.b16 %v1468, %v1460
    %v1685 = vpack.c.b16 %v1469, %v1461
    %v1686 = vpack.c.b16 %v1470, %v1462
    %v1687 = vpack.c.b16 %v1471, %v1463
    %v1688 = vpack.c.b16 %v1472, %v1464
    %v1689 = vpack.c.b16 %v1473, %v1465
    %v1690 = vpack.c.b16 %v1474, %v1466
    %v1691 = vpack.c.b16 %v1483, %v1475
    %v1692 = vpack.c.b16 %v1484, %v1476
    %v1693 = vpack.c.b16 %v1485, %v1477
    %v1694 = vpack.c.b16 %v1486, %v1478
    %v1695 = vpack.c.b16 %v1487, %v1479
    %v1696 = vpack.c.b16 %v1488, %v1480
    %v1697 = vpack.c.b16 %v1489, %v1481
    %v1698 = vpack.c.b16 %v1490, %v1482
    %v1699 = vpack.c.b16 %v1499, %v1491
    %v1700 = vpack.c.b16 %v1500, %v1492
    %v1701 = vpack.c.b16 %v1501, %v1493
    %v1702 = vpack.c.b16 %v1502, %v1494
    %v1703 = vpack.c.b16 %v1503, %v1495
    %v1704 = vpack.c.b16 %v1504, %v1496
    %v1705 = vpack.c.b16 %v1505, %v1497
    %v1706 = vpack.c.b16 %v1506, %v1498
    %v1707 = vpack.c.b16 %v1515, %v1507
    %v1708 = vpack.c.b16 %v1516, %v1508
    %v1709 = vpack.c.b16 %v1517, %v1509
    %v1710 = vpack.c.b16 %v1518, %v1510
    %v1711 = vpack.c.b16 %v1519, %v1511
    %v1712 = vpack.c.b16 %v1520, %v1512
    %v1713 = vpack.c.b16 %v1521, %v1513
    %v1714 = vpack.c.b16 %v1522, %v1514
    %v1715 = vpack.c.b16 %v1531, %v1523
    %v1716 = vpack.c.b16 %v1532, %v1524
    %v1717 = vpack.c.b16 %v1533, %v1525
    %v1718 = vpack.c.b16 %v1534, %v1526
    %v1719 = vpack.c.b16 %v1535, %v1527
    %v1720 = vpack.c.b16 %v1536, %v1528
    %v1721 = vpack.c.b16 %v1537, %v1529
    %v1722 = vpack.c.b16 %v1538, %v1530
    %v1723 = vpack.c.b16 %v1547, %v1539
    %v1724 = vpack.c.b16 %v1548, %v1540
    %v1725 = vpack.c.b16 %v1549, %v1541
    %v1726 = vpack.c.b16 %v1550, %v1542
    %v1727 = vpack.c.b16 %v1551, %v1543
    %v1728 = vpack.c.b16 %v1552, %v1544
    %v1729 = vpack.c.b16 %v1553, %v1545
    %v1730 = vpack.c.b16 %v1554, %v1546
    %v1731 = vpack.c.b16 %v1563, %v1555
    %v1732 = vpack.c.b16 %v1564, %v1556
    %v1733 = vpack.c.b16 %v1565, %v1557
    %v1734 = vpack.c.b16 %v1566, %v1558
    %v1735 = vpack.c.b16 %v1567, %v1559
    %v1736 = vpack.c.b16 %v1568, %v1560
    %v1737 = vpack.c.b16 %v1569, %v1561
    %v1738 = vpack.c.b16 %v1570, %v1562
    %v1739 = vpack.c.b16 %v1579, %v1571
    %v1740 = vpack.c.b16 %v1580, %v1572
    %v1741 = vpack.c.b16 %v1581, %v1573
    %v1742 = vpack.c.b16 %v1582, %v1574
    %v1743 = vpack.c.b16 %v1583, %v1575
    %v1744 = vpack.c.b16 %v1584, %v1576
    %v1745 = vpack.c.b16 %v1585, %v1577
    %v1746 = vpack.c.b16 %v1586, %v1578
    %v1747 = vpack.c.b16 %v1595, %v1587
    %v1748 = vpack.c.b16 %v1596, %v1588
    %v1749 = vpack.c.b16 %v1597, %v1589
    %v1750 = vpack.c.b16 %v1598, %v1590
    %v1751 = vpack.c.b16 %v1599, %v1591
    %v1752 = vpack.c.b16 %v1600, %v1592
    %v1753 = vpack.c.b16 %v1601, %v1593
    %v1754 = vpack.c.b16 %v1602, %v1594
    %v1755 = vpack.c.b16 %v1611, %v1603
    %v1756 = vpack.c.b16 %v1612, %v1604
    %v1757 = vpack.c.b16 %v1613, %v1605
    %v1758 = vpack.c.b16 %v1614, %v1606
    %v1759 = vpack.c.b16 %v1615, %v1607
    %v1760 = vpack.c.b16 %v1616, %v1608
    %v1761 = vpack.c.b16 %v1617, %v1609
    %v1762 = vpack.c.b16 %v1618, %v1610
    %v1763 = vpack.c.b16 %v1627, %v1619
    %v1764 = vpack.c.b16 %v1628, %v1620
    %v1765 = vpack.c.b16 %v1629, %v1621
    %v1766 = vpack.c.b16 %v1630, %v1622
    %v1767 = vpack.c.b16 %v1631, %v1623
    %v1768 = vpack.c.b16 %v1632, %v1624
    %v1769 = vpack.c.b16 %v1633, %v1625
    %v1770 = vpack.c.b16 %v1634, %v1626
    %v1771 = vpack.c.b16 %v1643, %v1635
    %v1772 = vpack.c.b16 %v1644, %v1636
    %v1773 = vpack.c.b16 %v1645, %v1637
    %v1774 = vpack.c.b16 %v1646, %v1638
    %v1775 = vpack.c.b16 %v1647, %v1639
    %v1776 = vpack.c.b16 %v1648, %v1640
    %v1777 = vpack.c.b16 %v1649, %v1641
    %v1778 = vpack.c.b16 %v1650, %v1642
    %1907 = vmatprep.subr.bf16.mxu0 %v1652
    %1908 = vmatpush1.bf16.msra.mxu0 %v1651
    %1909 = vmatprep.subr.bf16.mxu0 %v1660
    %1910 = vmatpush1.bf16.msra.mxu0 %v1659
    %1911 = vmatprep.subr.bf16.mxu0 %v1668
    %1912 = vmatpush1.bf16.msra.mxu0 %v1667
    %1913 = vmatprep.subr.bf16.mxu0 %v1676
    %1914 = vmatpush1.bf16.msra.mxu0 %v1675
    %1915 = vmatprep.subr.bf16.mxu0 %v1684
    %1916 = vmatpush1.bf16.msra.mxu0 %v1683
    %1917 = vmatprep.subr.bf16.mxu0 %v1692
    %1918 = vmatpush1.bf16.msra.mxu0 %v1691
    %1919 = vmatprep.subr.bf16.mxu0 %v1700
    %1920 = vmatpush1.bf16.msra.mxu0 %v1699
    %1921 = vmatprep.subr.bf16.mxu0 %v1708
    %1922 = vmatpush1.bf16.msra.mxu0 %v1707
    %1923 = vmatprep.subr.bf16.mxu0 %v1716
    %1924 = vmatpush1.bf16.msra.mxu0 %v1715
    %1925 = vmatprep.subr.bf16.mxu0 %v1724
    %1926 = vmatpush1.bf16.msra.mxu0 %v1723
    %1927 = vmatprep.subr.bf16.mxu0 %v1732
    %1928 = vmatpush1.bf16.msra.mxu0 %v1731
    %1929 = vmatprep.subr.bf16.mxu0 %v1740
    %1930 = vmatpush1.bf16.msra.mxu0 %v1739
    %1931 = vmatprep.subr.bf16.mxu0 %v1748
    %1932 = vmatpush1.bf16.msra.mxu0 %v1747
    %1933 = vmatprep.subr.bf16.mxu0 %v1756
    %1934 = vmatpush1.bf16.msra.mxu0 %v1755
    %1935 = vmatprep.subr.bf16.mxu0 %v1764
    %1936 = vmatpush1.bf16.msra.mxu0 %v1763
    %1937 = vmatprep.subr.bf16.mxu0 %v1772
    %1938 = vmatpush1.bf16.msra.mxu0 %v1771
    %1939 = vmatprep.mubr.bf16.mxu0 %v1132
    %1940 = vmatmul.mubr.bf16.gmra.mrb[0].mxu0 %v1131
    %v1941 = vpop.f32.mrb[0].mxu0
    %v1942 = vadd.f32 0.0, %v1941
    %v1943 = vpop.f32.mrb[0].mxu0
    %v1944 = vadd.f32 0.0, %v1943
    %v1945 = vpop.f32.mrb[0].mxu0
    %v1946 = vadd.f32 0.0, %v1945
    %v1947 = vpop.f32.mrb[0].mxu0
    %v1948 = vadd.f32 0.0, %v1947
    %1949 = vmatprep.mubr.bf16.mxu0 %v1134
    %1950 = vmatmul.mubr.bf16.gmra.mrb[0].mxu0 %v1133
    %v1951 = vpop.f32.mrb[0].mxu0
    %v1952 = vadd.f32 0.0, %v1951
    %v1953 = vpop.f32.mrb[0].mxu0
    %v1954 = vadd.f32 0.0, %v1953
    %v1955 = vpop.f32.mrb[0].mxu0
    %v1956 = vadd.f32 0.0, %v1955
    %v1957 = vpop.f32.mrb[0].mxu0
    %v1958 = vadd.f32 0.0, %v1957
    %1959 = vmatprep.mubr.bf16.mxu0 %v1136
    %1960 = vmatmul.mubr.bf16.gmra.mrb[0].mxu0 %v1135
    %v1961 = vpop.f32.mrb[0].mxu0
    %v1962 = vadd.f32 0.0, %v1961
    %v1963 = vpop.f32.mrb[0].mxu0
    %v1964 = vadd.f32 0.0, %v1963
    %v1965 = vpop.f32.mrb[0].mxu0
    %v1966 = vadd.f32 0.0, %v1965
    %v1967 = vpop.f32.mrb[0].mxu0
    %v1968 = vadd.f32 0.0, %v1967
    %1969 = vmatprep.mubr.bf16.mxu0 %v1138
    %1970 = vmatmul.mubr.bf16.gmra.mrb[0].mxu0 %v1137
    %v1971 = vpop.f32.mrb[0].mxu0
    %v1972 = vadd.f32 0.0, %v1971
    %v1973 = vpop.f32.mrb[0].mxu0
    %v1974 = vadd.f32 0.0, %v1973
    %v1975 = vpop.f32.mrb[0].mxu0
    %v1976 = vadd.f32 0.0, %v1975
    %v1977 = vpop.f32.mrb[0].mxu0
    %v1978 = vadd.f32 0.0, %v1977
    %1979 = vdwg.mxu0
    %1980 = vmatprep.subr.bf16.mxu0 %v1654
    %1981 = vmatpush1.bf16.msra.mxu0 %v1653
    %1982 = vmatprep.subr.bf16.mxu0 %v1662
    %1983 = vmatpush1.bf16.msra.mxu0 %v1661
    %1984 = vmatprep.subr.bf16.mxu0 %v1670
    %1985 = vmatpush1.bf16.msra.mxu0 %v1669
    %1986 = vmatprep.subr.bf16.mxu0 %v1678
    %1987 = vmatpush1.bf16.msra.mxu0 %v1677
    %1988 = vmatprep.subr.bf16.mxu0 %v1686
    %1989 = vmatpush1.bf16.msra.mxu0 %v1685
    %1990 = vmatprep.subr.bf16.mxu0 %v1694
    %1991 = vmatpush1.bf16.msra.mxu0 %v1693
    %1992 = vmatprep.subr.bf16.mxu0 %v1702
    %1993 = vmatpush1.bf16.msra.mxu0 %v1701
    %1994 = vmatprep.subr.bf16.mxu0 %v1710
    %1995 = vmatpush1.bf16.msra.mxu0 %v1709
    %1996 = vmatprep.subr.bf16.mxu0 %v1718
    %1997 = vmatpush1.bf16.msra.mxu0 %v1717
    %1998 = vmatprep.subr.bf16.mxu0 %v1726
    %1999 = vmatpush1.bf16.msra.mxu0 %v1725
    %2000 = vmatprep.subr.bf16.mxu0 %v1734
    %2001 = vmatpush1.bf16.msra.mxu0 %v1733
    %2002 = vmatprep.subr.bf16.mxu0 %v1742
    %2003 = vmatpush1.bf16.msra.mxu0 %v1741
    %2004 = vmatprep.subr.bf16.mxu0 %v1750
    %2005 = vmatpush1.bf16.msra.mxu0 %v1749
    %2006 = vmatprep.subr.bf16.mxu0 %v1758
    %2007 = vmatpush1.bf16.msra.mxu0 %v1757
    %2008 = vmatprep.subr.bf16.mxu0 %v1766
    %2009 = vmatpush1.bf16.msra.mxu0 %v1765
    %2010 = vmatprep.subr.bf16.mxu0 %v1774
    %2011 = vmatpush1.bf16.msra.mxu0 %v1773
    %2012 = vmatprep.mubr.bf16.mxu0 %v1132
    %2013 = vmatmul.mubr.bf16.gmra.mrb[0].mxu0 %v1131
    %v2014 = vpop.f32.mrb[0].mxu0
    %v2015 = vadd.f32 0.0, %v2014
    %v2016 = vpop.f32.mrb[0].mxu0
    %v2017 = vadd.f32 0.0, %v2016
    %v2018 = vpop.f32.mrb[0].mxu0
    %v2019 = vadd.f32 0.0, %v2018
    %v2020 = vpop.f32.mrb[0].mxu0
    %v2021 = vadd.f32 0.0, %v2020
    %2022 = vmatprep.mubr.bf16.mxu0 %v1134
    %2023 = vmatmul.mubr.bf16.gmra.mrb[0].mxu0 %v1133
    %v2024 = vpop.f32.mrb[0].mxu0
    %v2025 = vadd.f32 0.0, %v2024
    %v2026 = vpop.f32.mrb[0].mxu0
    %v2027 = vadd.f32 0.0, %v2026
    %v2028 = vpop.f32.mrb[0].mxu0
    %v2029 = vadd.f32 0.0, %v2028
    %v2030 = vpop.f32.mrb[0].mxu0
    %v2031 = vadd.f32 0.0, %v2030
    %2032 = vmatprep.mubr.bf16.mxu0 %v1136
    %2033 = vmatmul.mubr.bf16.gmra.mrb[0].mxu0 %v1135
    %v2034 = vpop.f32.mrb[0].mxu0
    %v2035 = vadd.f32 0.0, %v2034
    %v2036 = vpop.f32.mrb[0].mxu0
    %v2037 = vadd.f32 0.0, %v2036
    %v2038 = vpop.f32.mrb[0].mxu0
    %v2039 = vadd.f32 0.0, %v2038
    %v2040 = vpop.f32.mrb[0].mxu0
    %v2041 = vadd.f32 0.0, %v2040
    %2042 = vmatprep.mubr.bf16.mxu0 %v1138
    %2043 = vmatmul.mubr.bf16.gmra.mrb[0].mxu0 %v1137
    %v2044 = vpop.f32.mrb[0].mxu0
    %v2045 = vadd.f32 0.0, %v2044
    %v2046 = vpop.f32.mrb[0].mxu0
    %v2047 = vadd.f32 0.0, %v2046
    %v2048 = vpop.f32.mrb[0].mxu0
    %v2049 = vadd.f32 0.0, %v2048
    %v2050 = vpop.f32.mrb[0].mxu0
    %v2051 = vadd.f32 0.0, %v2050
    %2052 = vdwg.mxu0
    %2053 = vmatprep.subr.bf16.mxu0 %v1656
    %2054 = vmatpush1.bf16.msra.mxu0 %v1655
    %2055 = vmatprep.subr.bf16.mxu0 %v1664
    %2056 = vmatpush1.bf16.msra.mxu0 %v1663
    %2057 = vmatprep.subr.bf16.mxu0 %v1672
    %2058 = vmatpush1.bf16.msra.mxu0 %v1671
    %2059 = vmatprep.subr.bf16.mxu0 %v1680
    %2060 = vmatpush1.bf16.msra.mxu0 %v1679
    %2061 = vmatprep.subr.bf16.mxu0 %v1688
    %2062 = vmatpush1.bf16.msra.mxu0 %v1687
    %2063 = vmatprep.subr.bf16.mxu0 %v1696
    %2064 = vmatpush1.bf16.msra.mxu0 %v1695
    %2065 = vmatprep.subr.bf16.mxu0 %v1704
    %2066 = vmatpush1.bf16.msra.mxu0 %v1703
    %2067 = vmatprep.subr.bf16.mxu0 %v1712
    %2068 = vmatpush1.bf16.msra.mxu0 %v1711
    %2069 = vmatprep.subr.bf16.mxu0 %v1720
    %2070 = vmatpush1.bf16.msra.mxu0 %v1719
    %2071 = vmatprep.subr.bf16.mxu0 %v1728
    %2072 = vmatpush1.bf16.msra.mxu0 %v1727
    %2073 = vmatprep.subr.bf16.mxu0 %v1736
    %2074 = vmatpush1.bf16.msra.mxu0 %v1735
    %2075 = vmatprep.subr.bf16.mxu0 %v1744
    %2076 = vmatpush1.bf16.msra.mxu0 %v1743
    %2077 = vmatprep.subr.bf16.mxu0 %v1752
    %2078 = vmatpush1.bf16.msra.mxu0 %v1751
    %2079 = vmatprep.subr.bf16.mxu0 %v1760
    %2080 = vmatpush1.bf16.msra.mxu0 %v1759
    %2081 = vmatprep.subr.bf16.mxu0 %v1768
    %2082 = vmatpush1.bf16.msra.mxu0 %v1767
    %2083 = vmatprep.subr.bf16.mxu0 %v1776
    %2084 = vmatpush1.bf16.msra.mxu0 %v1775
    %2085 = vmatprep.mubr.bf16.mxu0 %v1132
    %2086 = vmatmul.mubr.bf16.gmra.mrb[0].mxu0 %v1131
    %v2087 = vpop.f32.mrb[0].mxu0
    %v2088 = vadd.f32 0.0, %v2087
    %v2089 = vpop.f32.mrb[0].mxu0
    %v2090 = vadd.f32 0.0, %v2089
    %v2091 = vpop.f32.mrb[0].mxu0
    %v2092 = vadd.f32 0.0, %v2091
    %v2093 = vpop.f32.mrb[0].mxu0
    %v2094 = vadd.f32 0.0, %v2093
    %2095 = vmatprep.mubr.bf16.mxu0 %v1134
    %2096 = vmatmul.mubr.bf16.gmra.mrb[0].mxu0 %v1133
    %v2097 = vpop.f32.mrb[0].mxu0
    %v2098 = vadd.f32 0.0, %v2097
    %v2099 = vpop.f32.mrb[0].mxu0
    %v2100 = vadd.f32 0.0, %v2099
    %v2101 = vpop.f32.mrb[0].mxu0
    %v2102 = vadd.f32 0.0, %v2101
    %v2103 = vpop.f32.mrb[0].mxu0
    %v2104 = vadd.f32 0.0, %v2103
    %2105 = vmatprep.mubr.bf16.mxu0 %v1136
    %2106 = vmatmul.mubr.bf16.gmra.mrb[0].mxu0 %v1135
    %v2107 = vpop.f32.mrb[0].mxu0
    %v2108 = vadd.f32 0.0, %v2107
    %v2109 = vpop.f32.mrb[0].mxu0
    %v2110 = vadd.f32 0.0, %v2109
    %v2111 = vpop.f32.mrb[0].mxu0
    %v2112 = vadd.f32 0.0, %v2111
    %v2113 = vpop.f32.mrb[0].mxu0
    %v2114 = vadd.f32 0.0, %v2113
    %2115 = vmatprep.mubr.bf16.mxu0 %v1138
    %2116 = vmatmul.mubr.bf16.gmra.mrb[0].mxu0 %v1137
    %v2117 = vpop.f32.mrb[0].mxu0
    %v2118 = vadd.f32 0.0, %v2117
    %v2119 = vpop.f32.mrb[0].mxu0
    %v2120 = vadd.f32 0.0, %v2119
    %v2121 = vpop.f32.mrb[0].mxu0
    %v2122 = vadd.f32 0.0, %v2121
    %v2123 = vpop.f32.mrb[0].mxu0
    %v2124 = vadd.f32 0.0, %v2123
    %2125 = vdwg.mxu0
    %2126 = vmatprep.subr.bf16.mxu0 %v1658
    %2127 = vmatpush1.bf16.msra.mxu0 %v1657
    %2128 = vmatprep.subr.bf16.mxu0 %v1666
    %2129 = vmatpush1.bf16.msra.mxu0 %v1665
    %2130 = vmatprep.subr.bf16.mxu0 %v1674
    %2131 = vmatpush1.bf16.msra.mxu0 %v1673
    %2132 = vmatprep.subr.bf16.mxu0 %v1682
    %2133 = vmatpush1.bf16.msra.mxu0 %v1681
    %2134 = vmatprep.subr.bf16.mxu0 %v1690
    %2135 = vmatpush1.bf16.msra.mxu0 %v1689
    %2136 = vmatprep.subr.bf16.mxu0 %v1698
    %2137 = vmatpush1.bf16.msra.mxu0 %v1697
    %2138 = vmatprep.subr.bf16.mxu0 %v1706
    %2139 = vmatpush1.bf16.msra.mxu0 %v1705
    %2140 = vmatprep.subr.bf16.mxu0 %v1714
    %2141 = vmatpush1.bf16.msra.mxu0 %v1713
    %2142 = vmatprep.subr.bf16.mxu0 %v1722
    %2143 = vmatpush1.bf16.msra.mxu0 %v1721
    %2144 = vmatprep.subr.bf16.mxu0 %v1730
    %2145 = vmatpush1.bf16.msra.mxu0 %v1729
    %2146 = vmatprep.subr.bf16.mxu0 %v1738
    %2147 = vmatpush1.bf16.msra.mxu0 %v1737
    %2148 = vmatprep.subr.bf16.mxu0 %v1746
    %2149 = vmatpush1.bf16.msra.mxu0 %v1745
    %2150 = vmatprep.subr.bf16.mxu0 %v1754
    %2151 = vmatpush1.bf16.msra.mxu0 %v1753
    %2152 = vmatprep.subr.bf16.mxu0 %v1762
    %2153 = vmatpush1.bf16.msra.mxu0 %v1761
    %2154 = vmatprep.subr.bf16.mxu0 %v1770
    %2155 = vmatpush1.bf16.msra.mxu0 %v1769
    %2156 = vmatprep.subr.bf16.mxu0 %v1778
    %2157 = vmatpush1.bf16.msra.mxu0 %v1777
    %2158 = vmatprep.mubr.bf16.mxu0 %v1132
    %2159 = vmatmul.mubr.bf16.gmra.mrb[0].mxu0 %v1131
    %v2160 = vpop.f32.mrb[0].mxu0
    %v2161 = vadd.f32 0.0, %v2160
    %v2162 = vpop.f32.mrb[0].mxu0
    %v2163 = vadd.f32 0.0, %v2162
    %v2164 = vpop.f32.mrb[0].mxu0
    %v2165 = vadd.f32 0.0, %v2164
    %v2166 = vpop.f32.mrb[0].mxu0
    %v2167 = vadd.f32 0.0, %v2166
    %2168 = vmatprep.mubr.bf16.mxu0 %v1134
    %2169 = vmatmul.mubr.bf16.gmra.mrb[0].mxu0 %v1133
    %v2170 = vpop.f32.mrb[0].mxu0
    %v2171 = vadd.f32 0.0, %v2170
    %v2172 = vpop.f32.mrb[0].mxu0
    %v2173 = vadd.f32 0.0, %v2172
    %v2174 = vpop.f32.mrb[0].mxu0
    %v2175 = vadd.f32 0.0, %v2174
    %v2176 = vpop.f32.mrb[0].mxu0
    %v2177 = vadd.f32 0.0, %v2176
    %2178 = vmatprep.mubr.bf16.mxu0 %v1136
    %2179 = vmatmul.mubr.bf16.gmra.mrb[0].mxu0 %v1135
    %v2180 = vpop.f32.mrb[0].mxu0
    %v2181 = vadd.f32 0.0, %v2180
    %v2182 = vpop.f32.mrb[0].mxu0
    %v2183 = vadd.f32 0.0, %v2182
    %v2184 = vpop.f32.mrb[0].mxu0
    %v2185 = vadd.f32 0.0, %v2184
    %v2186 = vpop.f32.mrb[0].mxu0
    %v2187 = vadd.f32 0.0, %v2186
    %2188 = vmatprep.mubr.bf16.mxu0 %v1138
    %2189 = vmatmul.mubr.bf16.gmra.mrb[0].mxu0 %v1137
    %v2190 = vpop.f32.mrb[0].mxu0
    %v2191 = vadd.f32 0.0, %v2190
    %v2192 = vpop.f32.mrb[0].mxu0
    %v2193 = vadd.f32 0.0, %v2192
    %v2194 = vpop.f32.mrb[0].mxu0
    %v2195 = vadd.f32 0.0, %v2194
    %v2196 = vpop.f32.mrb[0].mxu0
    %v2197 = vadd.f32 0.0, %v2196
    %2198 = vdwg.mxu0
    %v2231 = vunpack.c.l.b16 %v1099
    %v2232 = vunpack.c.h.b16 %v1099
    %v2233 = vunpack.c.l.b16 %v1100
    %v2234 = vunpack.c.h.b16 %v1100
    %v2235 = vunpack.c.l.b16 %v1101
    %v2236 = vunpack.c.h.b16 %v1101
    %v2237 = vunpack.c.l.b16 %v1102
    %v2238 = vunpack.c.h.b16 %v1102
    %v2239 = vunpack.c.l.b16 %v1103
    %v2240 = vunpack.c.h.b16 %v1103
    %v2241 = vunpack.c.l.b16 %v1104
    %v2242 = vunpack.c.h.b16 %v1104
    %v2243 = vunpack.c.l.b16 %v1105
    %v2244 = vunpack.c.h.b16 %v1105
    %v2245 = vunpack.c.l.b16 %v1106
    %v2246 = vunpack.c.h.b16 %v1106
    %v2247 = vunpack.c.l.b16 %v1107
    %v2248 = vunpack.c.h.b16 %v1107
    %v2249 = vunpack.c.l.b16 %v1108
    %v2250 = vunpack.c.h.b16 %v1108
    %v2251 = vunpack.c.l.b16 %v1109
    %v2252 = vunpack.c.h.b16 %v1109
    %v2253 = vunpack.c.l.b16 %v1110
    %v2254 = vunpack.c.h.b16 %v1110
    %v2255 = vunpack.c.l.b16 %v1111
    %v2256 = vunpack.c.h.b16 %v1111
    %v2257 = vunpack.c.l.b16 %v1112
    %v2258 = vunpack.c.h.b16 %v1112
    %v2259 = vunpack.c.l.b16 %v1113
    %v2260 = vunpack.c.h.b16 %v1113
    %v2261 = vunpack.c.l.b16 %v1114
    %v2262 = vunpack.c.h.b16 %v1114
    %v2263 = vunpack.c.l.b16 %v1115
    %v2264 = vunpack.c.h.b16 %v1115
    %v2265 = vunpack.c.l.b16 %v1116
    %v2266 = vunpack.c.h.b16 %v1116
    %v2267 = vunpack.c.l.b16 %v1117
    %v2268 = vunpack.c.h.b16 %v1117
    %v2269 = vunpack.c.l.b16 %v1118
    %v2270 = vunpack.c.h.b16 %v1118
    %v2271 = vunpack.c.l.b16 %v1119
    %v2272 = vunpack.c.h.b16 %v1119
    %v2273 = vunpack.c.l.b16 %v1120
    %v2274 = vunpack.c.h.b16 %v1120
    %v2275 = vunpack.c.l.b16 %v1121
    %v2276 = vunpack.c.h.b16 %v1121
    %v2277 = vunpack.c.l.b16 %v1122
    %v2278 = vunpack.c.h.b16 %v1122
    %v2279 = vunpack.c.l.b16 %v1123
    %v2280 = vunpack.c.h.b16 %v1123
    %v2281 = vunpack.c.l.b16 %v1124
    %v2282 = vunpack.c.h.b16 %v1124
    %v2283 = vunpack.c.l.b16 %v1125
    %v2284 = vunpack.c.h.b16 %v1125
    %v2285 = vunpack.c.l.b16 %v1126
    %v2286 = vunpack.c.h.b16 %v1126
    %v2287 = vunpack.c.l.b16 %v1127
    %v2288 = vunpack.c.h.b16 %v1127
    %v2289 = vunpack.c.l.b16 %v1128
    %v2290 = vunpack.c.h.b16 %v1128
    %v2291 = vunpack.c.l.b16 %v1129
    %v2292 = vunpack.c.h.b16 %v1129
    %v2293 = vunpack.c.l.b16 %v1130
    %v2294 = vunpack.c.h.b16 %v1130
    %v2295 = vpack.c.b16 %v2239, %v2231
    %v2296 = vpack.c.b16 %v2240, %v2232
    %v2297 = vpack.c.b16 %v2241, %v2233
    %v2298 = vpack.c.b16 %v2242, %v2234
    %v2299 = vpack.c.b16 %v2243, %v2235
    %v2300 = vpack.c.b16 %v2244, %v2236
    %v2301 = vpack.c.b16 %v2245, %v2237
    %v2302 = vpack.c.b16 %v2246, %v2238
    %v2303 = vpack.c.b16 %v2255, %v2247
    %v2304 = vpack.c.b16 %v2256, %v2248
    %v2305 = vpack.c.b16 %v2257, %v2249
    %v2306 = vpack.c.b16 %v2258, %v2250
    %v2307 = vpack.c.b16 %v2259, %v2251
    %v2308 = vpack.c.b16 %v2260, %v2252
    %v2309 = vpack.c.b16 %v2261, %v2253
    %v2310 = vpack.c.b16 %v2262, %v2254
    %v2311 = vpack.c.b16 %v2271, %v2263
    %v2312 = vpack.c.b16 %v2272, %v2264
    %v2313 = vpack.c.b16 %v2273, %v2265
    %v2314 = vpack.c.b16 %v2274, %v2266
    %v2315 = vpack.c.b16 %v2275, %v2267
    %v2316 = vpack.c.b16 %v2276, %v2268
    %v2317 = vpack.c.b16 %v2277, %v2269
    %v2318 = vpack.c.b16 %v2278, %v2270
    %v2319 = vpack.c.b16 %v2287, %v2279
    %v2320 = vpack.c.b16 %v2288, %v2280
    %v2321 = vpack.c.b16 %v2289, %v2281
    %v2322 = vpack.c.b16 %v2290, %v2282
    %v2323 = vpack.c.b16 %v2291, %v2283
    %v2324 = vpack.c.b16 %v2292, %v2284
    %v2325 = vpack.c.b16 %v2293, %v2285
    %v2326 = vpack.c.b16 %v2294, %v2286
    %vm2359 = vcmask 523264
    %v2361 = vsel %vm2359, %v1095, 0
    %v2364 = vsel %vm2359, %v1096, 0
    %v2367 = vsel %vm2359, %v1097, 0
    %v2370 = vsel %vm2359, %v1098, 0
    %2372 = vmatprep.subr.bf16.mxu0 %v2296
    %2373 = vmatpush1.bf16.msra.mxu0 %v2295
    %2374 = vmatprep.subr.bf16.mxu0 %v2304
    %2375 = vmatpush1.bf16.msra.mxu0 %v2303
    %2376 = vmatprep.subr.bf16.mxu0 %v2312
    %2377 = vmatpush1.bf16.msra.mxu0 %v2311
    %2378 = vmatprep.subr.bf16.mxu0 %v2320
    %2379 = vmatpush1.bf16.msra.mxu0 %v2319
    %2380 = vmatprep.subr.bf16.mxu0 0
    %2381 = vmatpush1.bf16.msra.mxu0 0
    %2382 = vmatprep.subr.bf16.mxu0 0
    %2383 = vmatpush1.bf16.msra.mxu0 0
    %2384 = vmatprep.subr.bf16.mxu0 0
    %2385 = vmatpush1.bf16.msra.mxu0 0
    %2386 = vmatprep.subr.bf16.mxu0 0
    %2387 = vmatpush1.bf16.msra.mxu0 0
    %2388 = vmatprep.subr.bf16.mxu0 0
    %2389 = vmatpush1.bf16.msra.mxu0 0
    %2390 = vmatprep.subr.bf16.mxu0 0
    %2391 = vmatpush1.bf16.msra.mxu0 0
    %2392 = vmatprep.subr.bf16.mxu0 0
    %2393 = vmatpush1.bf16.msra.mxu0 0
    %2394 = vmatprep.subr.bf16.mxu0 0
    %2395 = vmatpush1.bf16.msra.mxu0 0
    %2396 = vmatprep.subr.bf16.mxu0 0
    %2397 = vmatpush1.bf16.msra.mxu0 0
    %2398 = vmatprep.subr.bf16.mxu0 0
    %2399 = vmatpush1.bf16.msra.mxu0 0
    %2400 = vmatprep.subr.bf16.mxu0 0
    %2401 = vmatpush1.bf16.msra.mxu0 0
    %2402 = vmatprep.subr.bf16.mxu0 0
    %2403 = vmatpush1.bf16.msra.mxu0 0
    %2404 = vmatprep.mubr.bf16.mxu0 0
    %2405 = vmatmul.mubr.bf16.gmra.mrb[0].mxu0 %v2361
    %v2406 = vpop.f32.mrb[0].mxu0
    %v2407 = vadd.f32 %v1942, %v2406
    %v2408 = vpop.f32.mrb[0].mxu0
    %v2409 = vadd.f32 %v1944, %v2408
    %v2410 = vpop.f32.mrb[0].mxu0
    %v2411 = vadd.f32 %v1946, %v2410
    %v2412 = vpop.f32.mrb[0].mxu0
    %v2413 = vadd.f32 %v1948, %v2412
    %2414 = vmatprep.mubr.bf16.mxu0 0
    %2415 = vmatmul.mubr.bf16.gmra.mrb[0].mxu0 %v2364
    %v2416 = vpop.f32.mrb[0].mxu0
    %v2417 = vadd.f32 %v1952, %v2416
    %v2418 = vpop.f32.mrb[0].mxu0
    %v2419 = vadd.f32 %v1954, %v2418
    %v2420 = vpop.f32.mrb[0].mxu0
    %v2421 = vadd.f32 %v1956, %v2420
    %v2422 = vpop.f32.mrb[0].mxu0
    %v2423 = vadd.f32 %v1958, %v2422
    %2424 = vmatprep.mubr.bf16.mxu0 0
    %2425 = vmatmul.mubr.bf16.gmra.mrb[0].mxu0 %v2367
    %v2426 = vpop.f32.mrb[0].mxu0
    %v2427 = vadd.f32 %v1962, %v2426
    %v2428 = vpop.f32.mrb[0].mxu0
    %v2429 = vadd.f32 %v1964, %v2428
    %v2430 = vpop.f32.mrb[0].mxu0
    %v2431 = vadd.f32 %v1966, %v2430
    %v2432 = vpop.f32.mrb[0].mxu0
    %v2433 = vadd.f32 %v1968, %v2432
    %2434 = vmatprep.mubr.bf16.mxu0 0
    %2435 = vmatmul.mubr.bf16.gmra.mrb[0].mxu0 %v2370
    %v2436 = vpop.f32.mrb[0].mxu0
    %v2437 = vadd.f32 %v1972, %v2436
    %v2438 = vpop.f32.mrb[0].mxu0
    %v2439 = vadd.f32 %v1974, %v2438
    %v2440 = vpop.f32.mrb[0].mxu0
    %v2441 = vadd.f32 %v1976, %v2440
    %v2442 = vpop.f32.mrb[0].mxu0
    %v2443 = vadd.f32 %v1978, %v2442
    %2444 = vdwg.mxu0
    %2445 = vmatprep.subr.bf16.mxu0 %v2298
    %2446 = vmatpush1.bf16.msra.mxu0 %v2297
    %2447 = vmatprep.subr.bf16.mxu0 %v2306
    %2448 = vmatpush1.bf16.msra.mxu0 %v2305
    %2449 = vmatprep.subr.bf16.mxu0 %v2314
    %2450 = vmatpush1.bf16.msra.mxu0 %v2313
    %2451 = vmatprep.subr.bf16.mxu0 %v2322
    %2452 = vmatpush1.bf16.msra.mxu0 %v2321
    %2453 = vmatprep.subr.bf16.mxu0 0
    %2454 = vmatpush1.bf16.msra.mxu0 0
    %2455 = vmatprep.subr.bf16.mxu0 0
    %2456 = vmatpush1.bf16.msra.mxu0 0
    %2457 = vmatprep.subr.bf16.mxu0 0
    %2458 = vmatpush1.bf16.msra.mxu0 0
    %2459 = vmatprep.subr.bf16.mxu0 0
    %2460 = vmatpush1.bf16.msra.mxu0 0
    %2461 = vmatprep.subr.bf16.mxu0 0
    %2462 = vmatpush1.bf16.msra.mxu0 0
    %2463 = vmatprep.subr.bf16.mxu0 0
    %2464 = vmatpush1.bf16.msra.mxu0 0
    %2465 = vmatprep.subr.bf16.mxu0 0
    %2466 = vmatpush1.bf16.msra.mxu0 0
    %2467 = vmatprep.subr.bf16.mxu0 0
    %2468 = vmatpush1.bf16.msra.mxu0 0
    %2469 = vmatprep.subr.bf16.mxu0 0
    %2470 = vmatpush1.bf16.msra.mxu0 0
    %2471 = vmatprep.subr.bf16.mxu0 0
    %2472 = vmatpush1.bf16.msra.mxu0 0
    %2473 = vmatprep.subr.bf16.mxu0 0
    %2474 = vmatpush1.bf16.msra.mxu0 0
    %2475 = vmatprep.subr.bf16.mxu0 0
    %2476 = vmatpush1.bf16.msra.mxu0 0
    %2477 = vmatprep.mubr.bf16.mxu0 0
    %2478 = vmatmul.mubr.bf16.gmra.mrb[0].mxu0 %v2361
    %v2479 = vpop.f32.mrb[0].mxu0
    %v2480 = vadd.f32 %v2015, %v2479
    %v2481 = vpop.f32.mrb[0].mxu0
    %v2482 = vadd.f32 %v2017, %v2481
    %v2483 = vpop.f32.mrb[0].mxu0
    %v2484 = vadd.f32 %v2019, %v2483
    %v2485 = vpop.f32.mrb[0].mxu0
    %v2486 = vadd.f32 %v2021, %v2485
    %2487 = vmatprep.mubr.bf16.mxu0 0
    %2488 = vmatmul.mubr.bf16.gmra.mrb[0].mxu0 %v2364
    %v2489 = vpop.f32.mrb[0].mxu0
    %v2490 = vadd.f32 %v2025, %v2489
    %v2491 = vpop.f32.mrb[0].mxu0
    %v2492 = vadd.f32 %v2027, %v2491
    %v2493 = vpop.f32.mrb[0].mxu0
    %v2494 = vadd.f32 %v2029, %v2493
    %v2495 = vpop.f32.mrb[0].mxu0
    %v2496 = vadd.f32 %v2031, %v2495
    %2497 = vmatprep.mubr.bf16.mxu0 0
    %2498 = vmatmul.mubr.bf16.gmra.mrb[0].mxu0 %v2367
    %v2499 = vpop.f32.mrb[0].mxu0
    %v2500 = vadd.f32 %v2035, %v2499
    %v2501 = vpop.f32.mrb[0].mxu0
    %v2502 = vadd.f32 %v2037, %v2501
    %v2503 = vpop.f32.mrb[0].mxu0
    %v2504 = vadd.f32 %v2039, %v2503
    %v2505 = vpop.f32.mrb[0].mxu0
    %v2506 = vadd.f32 %v2041, %v2505
    %2507 = vmatprep.mubr.bf16.mxu0 0
    %2508 = vmatmul.mubr.bf16.gmra.mrb[0].mxu0 %v2370
    %v2509 = vpop.f32.mrb[0].mxu0
    %v2510 = vadd.f32 %v2045, %v2509
    %v2511 = vpop.f32.mrb[0].mxu0
    %v2512 = vadd.f32 %v2047, %v2511
    %v2513 = vpop.f32.mrb[0].mxu0
    %v2514 = vadd.f32 %v2049, %v2513
    %v2515 = vpop.f32.mrb[0].mxu0
    %v2516 = vadd.f32 %v2051, %v2515
    %2517 = vdwg.mxu0
    %2518 = vmatprep.subr.bf16.mxu0 %v2300
    %2519 = vmatpush1.bf16.msra.mxu0 %v2299
    %2520 = vmatprep.subr.bf16.mxu0 %v2308
    %2521 = vmatpush1.bf16.msra.mxu0 %v2307
    %2522 = vmatprep.subr.bf16.mxu0 %v2316
    %2523 = vmatpush1.bf16.msra.mxu0 %v2315
    %2524 = vmatprep.subr.bf16.mxu0 %v2324
    %2525 = vmatpush1.bf16.msra.mxu0 %v2323
    %2526 = vmatprep.subr.bf16.mxu0 0
    %2527 = vmatpush1.bf16.msra.mxu0 0
    %2528 = vmatprep.subr.bf16.mxu0 0
    %2529 = vmatpush1.bf16.msra.mxu0 0
    %2530 = vmatprep.subr.bf16.mxu0 0
    %2531 = vmatpush1.bf16.msra.mxu0 0
    %2532 = vmatprep.subr.bf16.mxu0 0
    %2533 = vmatpush1.bf16.msra.mxu0 0
    %2534 = vmatprep.subr.bf16.mxu0 0
    %2535 = vmatpush1.bf16.msra.mxu0 0
    %2536 = vmatprep.subr.bf16.mxu0 0
    %2537 = vmatpush1.bf16.msra.mxu0 0
    %2538 = vmatprep.subr.bf16.mxu0 0
    %2539 = vmatpush1.bf16.msra.mxu0 0
    %2540 = vmatprep.subr.bf16.mxu0 0
    %2541 = vmatpush1.bf16.msra.mxu0 0
    %2542 = vmatprep.subr.bf16.mxu0 0
    %2543 = vmatpush1.bf16.msra.mxu0 0
    %2544 = vmatprep.subr.bf16.mxu0 0
    %2545 = vmatpush1.bf16.msra.mxu0 0
    %2546 = vmatprep.subr.bf16.mxu0 0
    %2547 = vmatpush1.bf16.msra.mxu0 0
    %2548 = vmatprep.subr.bf16.mxu0 0
    %2549 = vmatpush1.bf16.msra.mxu0 0
    %2550 = vmatprep.mubr.bf16.mxu0 0
    %2551 = vmatmul.mubr.bf16.gmra.mrb[0].mxu0 %v2361
    %v2552 = vpop.f32.mrb[0].mxu0
    %v2553 = vadd.f32 %v2088, %v2552
    %v2554 = vpop.f32.mrb[0].mxu0
    %v2555 = vadd.f32 %v2090, %v2554
    %v2556 = vpop.f32.mrb[0].mxu0
    %v2557 = vadd.f32 %v2092, %v2556
    %v2558 = vpop.f32.mrb[0].mxu0
    %v2559 = vadd.f32 %v2094, %v2558
    %2560 = vmatprep.mubr.bf16.mxu0 0
    %2561 = vmatmul.mubr.bf16.gmra.mrb[0].mxu0 %v2364
    %v2562 = vpop.f32.mrb[0].mxu0
    %v2563 = vadd.f32 %v2098, %v2562
    %v2564 = vpop.f32.mrb[0].mxu0
    %v2565 = vadd.f32 %v2100, %v2564
    %v2566 = vpop.f32.mrb[0].mxu0
    %v2567 = vadd.f32 %v2102, %v2566
    %v2568 = vpop.f32.mrb[0].mxu0
    %v2569 = vadd.f32 %v2104, %v2568
    %2570 = vmatprep.mubr.bf16.mxu0 0
    %2571 = vmatmul.mubr.bf16.gmra.mrb[0].mxu0 %v2367
    %v2572 = vpop.f32.mrb[0].mxu0
    %v2573 = vadd.f32 %v2108, %v2572
    %v2574 = vpop.f32.mrb[0].mxu0
    %v2575 = vadd.f32 %v2110, %v2574
    %v2576 = vpop.f32.mrb[0].mxu0
    %v2577 = vadd.f32 %v2112, %v2576
    %v2578 = vpop.f32.mrb[0].mxu0
    %v2579 = vadd.f32 %v2114, %v2578
    %2580 = vmatprep.mubr.bf16.mxu0 0
    %2581 = vmatmul.mubr.bf16.gmra.mrb[0].mxu0 %v2370
    %v2582 = vpop.f32.mrb[0].mxu0
    %v2583 = vadd.f32 %v2118, %v2582
    %v2584 = vpop.f32.mrb[0].mxu0
    %v2585 = vadd.f32 %v2120, %v2584
    %v2586 = vpop.f32.mrb[0].mxu0
    %v2587 = vadd.f32 %v2122, %v2586
    %v2588 = vpop.f32.mrb[0].mxu0
    %v2589 = vadd.f32 %v2124, %v2588
    %2590 = vdwg.mxu0
    %2591 = vmatprep.subr.bf16.mxu0 %v2302
    %2592 = vmatpush1.bf16.msra.mxu0 %v2301
    %2593 = vmatprep.subr.bf16.mxu0 %v2310
    %2594 = vmatpush1.bf16.msra.mxu0 %v2309
    %2595 = vmatprep.subr.bf16.mxu0 %v2318
    %2596 = vmatpush1.bf16.msra.mxu0 %v2317
    %2597 = vmatprep.subr.bf16.mxu0 %v2326
    %2598 = vmatpush1.bf16.msra.mxu0 %v2325
    %2599 = vmatprep.subr.bf16.mxu0 0
    %2600 = vmatpush1.bf16.msra.mxu0 0
    %2601 = vmatprep.subr.bf16.mxu0 0
    %2602 = vmatpush1.bf16.msra.mxu0 0
    %2603 = vmatprep.subr.bf16.mxu0 0
    %2604 = vmatpush1.bf16.msra.mxu0 0
    %2605 = vmatprep.subr.bf16.mxu0 0
    %2606 = vmatpush1.bf16.msra.mxu0 0
    %2607 = vmatprep.subr.bf16.mxu0 0
    %2608 = vmatpush1.bf16.msra.mxu0 0
    %2609 = vmatprep.subr.bf16.mxu0 0
    %2610 = vmatpush1.bf16.msra.mxu0 0
    %2611 = vmatprep.subr.bf16.mxu0 0
    %2612 = vmatpush1.bf16.msra.mxu0 0
    %2613 = vmatprep.subr.bf16.mxu0 0
    %2614 = vmatpush1.bf16.msra.mxu0 0
    %2615 = vmatprep.subr.bf16.mxu0 0
    %2616 = vmatpush1.bf16.msra.mxu0 0
    %2617 = vmatprep.subr.bf16.mxu0 0
    %2618 = vmatpush1.bf16.msra.mxu0 0
    %2619 = vmatprep.subr.bf16.mxu0 0
    %2620 = vmatpush1.bf16.msra.mxu0 0
    %2621 = vmatprep.subr.bf16.mxu0 0
    %2622 = vmatpush1.bf16.msra.mxu0 0
    %2623 = vmatprep.mubr.bf16.mxu0 0
    %2624 = vmatmul.mubr.bf16.gmra.mrb[0].mxu0 %v2361
    %v2625 = vpop.f32.mrb[0].mxu0
    %v2626 = vadd.f32 %v2161, %v2625
    %v2627 = vpop.f32.mrb[0].mxu0
    %v2628 = vadd.f32 %v2163, %v2627
    %v2629 = vpop.f32.mrb[0].mxu0
    %v2630 = vadd.f32 %v2165, %v2629
    %v2631 = vpop.f32.mrb[0].mxu0
    %v2632 = vadd.f32 %v2167, %v2631
    %2633 = vmatprep.mubr.bf16.mxu0 0
    %2634 = vmatmul.mubr.bf16.gmra.mrb[0].mxu0 %v2364
    %v2635 = vpop.f32.mrb[0].mxu0
    %v2636 = vadd.f32 %v2171, %v2635
    %v2637 = vpop.f32.mrb[0].mxu0
    %v2638 = vadd.f32 %v2173, %v2637
    %v2639 = vpop.f32.mrb[0].mxu0
    %v2640 = vadd.f32 %v2175, %v2639
    %v2641 = vpop.f32.mrb[0].mxu0
    %v2642 = vadd.f32 %v2177, %v2641
    %2643 = vmatprep.mubr.bf16.mxu0 0
    %2644 = vmatmul.mubr.bf16.gmra.mrb[0].mxu0 %v2367
    %v2645 = vpop.f32.mrb[0].mxu0
    %v2646 = vadd.f32 %v2181, %v2645
    %v2647 = vpop.f32.mrb[0].mxu0
    %v2648 = vadd.f32 %v2183, %v2647
    %v2649 = vpop.f32.mrb[0].mxu0
    %v2650 = vadd.f32 %v2185, %v2649
    %v2651 = vpop.f32.mrb[0].mxu0
    %v2652 = vadd.f32 %v2187, %v2651
    %2653 = vmatprep.mubr.bf16.mxu0 0
    %2654 = vmatmul.mubr.bf16.gmra.mrb[0].mxu0 %v2370
    %v2655 = vpop.f32.mrb[0].mxu0
    %v2656 = vadd.f32 %v2191, %v2655
    %v2657 = vpop.f32.mrb[0].mxu0
    %v2658 = vadd.f32 %v2193, %v2657
    %v2659 = vpop.f32.mrb[0].mxu0
    %v2660 = vadd.f32 %v2195, %v2659
    %v2661 = vpop.f32.mrb[0].mxu0
    %v2662 = vadd.f32 %v2197, %v2661
    %2663 = vdwg.mxu0
    %v2664 = vld [vmem:[%s7] sm:$0xff]
    %v2665 = vld [vmem:[%s7 + $0x8] sm:$0xff]
    %v2666 = vld [vmem:[%s7 + $0x10] sm:$0xff]
    %v2667 = vld [vmem:[%s7 + $0x18] sm:$0xff]
    %v2668 = vld [vmem:[%s7 + $0x20] sm:$0xff]
    %v2669 = vld [vmem:[%s7 + $0x28] sm:$0xff]
    %v2670 = vld [vmem:[%s7 + $0x30] sm:$0xff]
    %v2671 = vld [vmem:[%s7 + $0x38] sm:$0xff]
    %2673 = vset.pattern.permute.xlu0 0
    %2674 = vperm.xlu0 %2673, %v2664
    %v2675 = vpop.permute.xlu0 %2674
    %2678 = vset.pattern.permute.xlu0 0
    %2679 = vperm.xlu0 %2678, %v2665
    %v2680 = vpop.permute.xlu0 %2679
    %2683 = vset.pattern.permute.xlu0 0
    %2684 = vperm.xlu0 %2683, %v2666
    %v2685 = vpop.permute.xlu0 %2684
    %2688 = vset.pattern.permute.xlu0 0
    %2689 = vperm.xlu0 %2688, %v2667
    %v2690 = vpop.permute.xlu0 %2689
    %2693 = vset.pattern.permute.xlu0 0
    %2694 = vperm.xlu0 %2693, %v2668
    %v2695 = vpop.permute.xlu0 %2694
    %2698 = vset.pattern.permute.xlu0 0
    %2699 = vperm.xlu0 %2698, %v2669
    %v2700 = vpop.permute.xlu0 %2699
    %2703 = vset.pattern.permute.xlu0 0
    %2704 = vperm.xlu0 %2703, %v2670
    %v2705 = vpop.permute.xlu0 %2704
    %2708 = vset.pattern.permute.xlu0 0
    %2709 = vperm.xlu0 %2708, %v2671
    %v2710 = vpop.permute.xlu0 %2709
    %v2712 = vadd.f32 %v2407, %v2675
    %v2713 = vadd.f32 %v2409, %v2675
    %v2714 = vadd.f32 %v2480, %v2675
    %v2715 = vadd.f32 %v2482, %v2675
    %v2716 = vadd.f32 %v2553, %v2675
    %v2717 = vadd.f32 %v2555, %v2675
    %v2718 = vadd.f32 %v2626, %v2675
    %v2719 = vadd.f32 %v2628, %v2675
    %v2720 = vadd.f32 %v2411, %v2680
    %v2721 = vadd.f32 %v2413, %v2680
    %v2722 = vadd.f32 %v2484, %v2680
    %v2723 = vadd.f32 %v2486, %v2680
    %v2724 = vadd.f32 %v2557, %v2680
    %v2725 = vadd.f32 %v2559, %v2680
    %v2726 = vadd.f32 %v2630, %v2680
    %v2727 = vadd.f32 %v2632, %v2680
    %v2728 = vadd.f32 %v2417, %v2685
    %v2729 = vadd.f32 %v2419, %v2685
    %v2730 = vadd.f32 %v2490, %v2685
    %v2731 = vadd.f32 %v2492, %v2685
    %v2732 = vadd.f32 %v2563, %v2685
    %v2733 = vadd.f32 %v2565, %v2685
    %v2734 = vadd.f32 %v2636, %v2685
    %v2735 = vadd.f32 %v2638, %v2685
    %v2736 = vadd.f32 %v2421, %v2690
    %v2737 = vadd.f32 %v2423, %v2690
    %v2738 = vadd.f32 %v2494, %v2690
    %v2739 = vadd.f32 %v2496, %v2690
    %v2740 = vadd.f32 %v2567, %v2690
    %v2741 = vadd.f32 %v2569, %v2690
    %v2742 = vadd.f32 %v2640, %v2690
    %v2743 = vadd.f32 %v2642, %v2690
    %v2744 = vadd.f32 %v2427, %v2695
    %v2745 = vadd.f32 %v2429, %v2695
    %v2746 = vadd.f32 %v2500, %v2695
    %v2747 = vadd.f32 %v2502, %v2695
    %v2748 = vadd.f32 %v2573, %v2695
    %v2749 = vadd.f32 %v2575, %v2695
    %v2750 = vadd.f32 %v2646, %v2695
    %v2751 = vadd.f32 %v2648, %v2695
    %v2752 = vadd.f32 %v2431, %v2700
    %v2753 = vadd.f32 %v2433, %v2700
    %v2754 = vadd.f32 %v2504, %v2700
    %v2755 = vadd.f32 %v2506, %v2700
    %v2756 = vadd.f32 %v2577, %v2700
    %v2757 = vadd.f32 %v2579, %v2700
    %v2758 = vadd.f32 %v2650, %v2700
    %v2759 = vadd.f32 %v2652, %v2700
    %v2760 = vadd.f32 %v2437, %v2705
    %v2761 = vadd.f32 %v2439, %v2705
    %v2762 = vadd.f32 %v2510, %v2705
    %v2763 = vadd.f32 %v2512, %v2705
    %v2764 = vadd.f32 %v2583, %v2705
    %v2765 = vadd.f32 %v2585, %v2705
    %v2766 = vadd.f32 %v2656, %v2705
    %v2767 = vadd.f32 %v2658, %v2705
    %v2768 = vadd.f32 %v2441, %v2710
    %v2769 = vadd.f32 %v2443, %v2710
    %v2770 = vadd.f32 %v2514, %v2710
    %v2771 = vadd.f32 %v2516, %v2710
    %v2772 = vadd.f32 %v2587, %v2710
    %v2773 = vadd.f32 %v2589, %v2710
    %v2774 = vadd.f32 %v2660, %v2710
    %v2775 = vadd.f32 %v2662, %v2710
    %v2776 = vld [vmem:[#allocation2] sm:$0xff]
    %v2777 = vld [vmem:[#allocation2 + $0x8] sm:$0xff]
    %v2778 = vld [vmem:[#allocation2 + $0x10] sm:$0xff]
    %v2779 = vld [vmem:[#allocation2 + $0x18] sm:$0xff]
    %v2780 = vld [vmem:[#allocation2 + $0x20] sm:$0xff]
    %v2781 = vld [vmem:[#allocation2 + $0x28] sm:$0xff]
    %v2782 = vld [vmem:[#allocation2 + $0x30] sm:$0xff]
    %v2783 = vld [vmem:[#allocation2 + $0x38] sm:$0xff]
    %v2784 = vld [vmem:[#allocation2 + $0x40] sm:$0xff]
    %v2785 = vld [vmem:[#allocation2 + $0x48] sm:$0xff]
    %v2786 = vld [vmem:[#allocation2 + $0x50] sm:$0xff]
    %v2787 = vld [vmem:[#allocation2 + $0x58] sm:$0xff]
    %v2788 = vld [vmem:[#allocation2 + $0x60] sm:$0xff]
    %v2789 = vld [vmem:[#allocation2 + $0x68] sm:$0xff]
    %v2790 = vld [vmem:[#allocation2 + $0x70] sm:$0xff]
    %v2791 = vld [vmem:[#allocation2 + $0x78] sm:$0xff]
    %v2792 = vld [vmem:[#allocation2 + $0x80] sm:$0xff]
    %v2793 = vld [vmem:[#allocation2 + $0x88] sm:$0xff]
    %v2794 = vld [vmem:[#allocation2 + $0x90] sm:$0xff]
    %v2795 = vld [vmem:[#allocation2 + $0x98] sm:$0xff]
    %v2796 = vld [vmem:[#allocation2 + $0xa0] sm:$0xff]
    %v2797 = vld [vmem:[#allocation2 + $0xa8] sm:$0xff]
    %v2798 = vld [vmem:[#allocation2 + $0xb0] sm:$0xff]
    %v2799 = vld [vmem:[#allocation2 + $0xb8] sm:$0xff]
    %v2800 = vld [vmem:[#allocation2 + $0xc0] sm:$0xff]
    %v2801 = vld [vmem:[#allocation2 + $0xc8] sm:$0xff]
    %v2802 = vld [vmem:[#allocation2 + $0xd0] sm:$0xff]
    %v2803 = vld [vmem:[#allocation2 + $0xd8] sm:$0xff]
    %v2804 = vld [vmem:[#allocation2 + $0xe0] sm:$0xff]
    %v2805 = vld [vmem:[#allocation2 + $0xe8] sm:$0xff]
    %v2806 = vld [vmem:[#allocation2 + $0xf0] sm:$0xff]
    %v2807 = vld [vmem:[#allocation2 + $0xf8] sm:$0xff]
    %v2808 = vld [vmem:[#allocation2 + $0x100] sm:$0xff]
    %v2809 = vld [vmem:[#allocation2 + $0x108] sm:$0xff]
    %v2810 = vld [vmem:[#allocation2 + $0x110] sm:$0xff]
    %v2811 = vld [vmem:[#allocation2 + $0x118] sm:$0xff]
    %v2812 = vld [vmem:[#allocation2 + $0x120] sm:$0xff]
    %v2813 = vld [vmem:[#allocation2 + $0x128] sm:$0xff]
    %v2814 = vld [vmem:[#allocation2 + $0x130] sm:$0xff]
    %v2815 = vld [vmem:[#allocation2 + $0x138] sm:$0xff]
    %v2816 = vld [vmem:[#allocation2 + $0x140] sm:$0xff]
    %v2817 = vld [vmem:[#allocation2 + $0x148] sm:$0xff]
    %v2818 = vld [vmem:[#allocation2 + $0x150] sm:$0xff]
    %v2819 = vld [vmem:[#allocation2 + $0x158] sm:$0xff]
    %v2820 = vld [vmem:[#allocation2 + $0x160] sm:$0xff]
    %v2821 = vld [vmem:[#allocation2 + $0x168] sm:$0xff]
    %v2822 = vld [vmem:[#allocation2 + $0x170] sm:$0xff]
    %v2823 = vld [vmem:[#allocation2 + $0x178] sm:$0xff]
    %v2824 = vld [vmem:[#allocation2 + $0x180] sm:$0xff]
    %v2825 = vld [vmem:[#allocation2 + $0x188] sm:$0xff]
    %v2826 = vld [vmem:[#allocation2 + $0x190] sm:$0xff]
    %v2827 = vld [vmem:[#allocation2 + $0x198] sm:$0xff]
    %v2828 = vld [vmem:[#allocation2 + $0x1a0] sm:$0xff]
    %v2829 = vld [vmem:[#allocation2 + $0x1a8] sm:$0xff]
    %v2830 = vld [vmem:[#allocation2 + $0x1b0] sm:$0xff]
    %v2831 = vld [vmem:[#allocation2 + $0x1b8] sm:$0xff]
    %v2832 = vld [vmem:[#allocation2 + $0x1c0] sm:$0xff]
    %v2833 = vld [vmem:[#allocation2 + $0x1c8] sm:$0xff]
    %v2834 = vld [vmem:[#allocation2 + $0x1d0] sm:$0xff]
    %v2835 = vld [vmem:[#allocation2 + $0x1d8] sm:$0xff]
    %v2836 = vld [vmem:[#allocation2 + $0x1e0] sm:$0xff]
    %v2837 = vld [vmem:[#allocation2 + $0x1e8] sm:$0xff]
    %v2838 = vld [vmem:[#allocation2 + $0x1f0] sm:$0xff]
    %v2839 = vld [vmem:[#allocation2 + $0x1f8] sm:$0xff]
    %v2840 = vadd.f32 %v2712, %v2776
    %v2841 = vadd.f32 %v2713, %v2777
    %v2842 = vadd.f32 %v2714, %v2778
    %v2843 = vadd.f32 %v2715, %v2779
    %v2844 = vadd.f32 %v2716, %v2780
    %v2845 = vadd.f32 %v2717, %v2781
    %v2846 = vadd.f32 %v2718, %v2782
    %v2847 = vadd.f32 %v2719, %v2783
    %v2848 = vadd.f32 %v2720, %v2784
    %v2849 = vadd.f32 %v2721, %v2785
    %v2850 = vadd.f32 %v2722, %v2786
    %v2851 = vadd.f32 %v2723, %v2787
    %v2852 = vadd.f32 %v2724, %v2788
    %v2853 = vadd.f32 %v2725, %v2789
    %v2854 = vadd.f32 %v2726, %v2790
    %v2855 = vadd.f32 %v2727, %v2791
    %v2856 = vadd.f32 %v2728, %v2792
    %v2857 = vadd.f32 %v2729, %v2793
    %v2858 = vadd.f32 %v2730, %v2794
    %v2859 = vadd.f32 %v2731, %v2795
    %v2860 = vadd.f32 %v2732, %v2796
    %v2861 = vadd.f32 %v2733, %v2797
    %v2862 = vadd.f32 %v2734, %v2798
    %v2863 = vadd.f32 %v2735, %v2799
    %v2864 = vadd.f32 %v2736, %v2800
    %v2865 = vadd.f32 %v2737, %v2801
    %v2866 = vadd.f32 %v2738, %v2802
    %v2867 = vadd.f32 %v2739, %v2803
    %v2868 = vadd.f32 %v2740, %v2804
    %v2869 = vadd.f32 %v2741, %v2805
    %v2870 = vadd.f32 %v2742, %v2806
    %v2871 = vadd.f32 %v2743, %v2807
    %v2872 = vadd.f32 %v2744, %v2808
    %v2873 = vadd.f32 %v2745, %v2809
    %v2874 = vadd.f32 %v2746, %v2810
    %v2875 = vadd.f32 %v2747, %v2811
    %v2876 = vadd.f32 %v2748, %v2812
    %v2877 = vadd.f32 %v2749, %v2813
    %v2878 = vadd.f32 %v2750, %v2814
    %v2879 = vadd.f32 %v2751, %v2815
    %v2880 = vadd.f32 %v2752, %v2816
    %v2881 = vadd.f32 %v2753, %v2817
    %v2882 = vadd.f32 %v2754, %v2818
    %v2883 = vadd.f32 %v2755, %v2819
    %v2884 = vadd.f32 %v2756, %v2820
    %v2885 = vadd.f32 %v2757, %v2821
    %v2886 = vadd.f32 %v2758, %v2822
    %v2887 = vadd.f32 %v2759, %v2823
    %v2888 = vadd.f32 %v2760, %v2824
    %v2889 = vadd.f32 %v2761, %v2825
    %v2890 = vadd.f32 %v2762, %v2826
    %v2891 = vadd.f32 %v2763, %v2827
    %v2892 = vadd.f32 %v2764, %v2828
    %v2893 = vadd.f32 %v2765, %v2829
    %v2894 = vadd.f32 %v2766, %v2830
    %v2895 = vadd.f32 %v2767, %v2831
    %v2896 = vadd.f32 %v2768, %v2832
    %v2897 = vadd.f32 %v2769, %v2833
    %v2898 = vadd.f32 %v2770, %v2834
    %v2899 = vadd.f32 %v2771, %v2835
    %v2900 = vadd.f32 %v2772, %v2836
    %v2901 = vadd.f32 %v2773, %v2837
    %v2902 = vadd.f32 %v2774, %v2838
    %v2903 = vadd.f32 %v2775, %v2839
    %2904 = vst [vmem:[#allocation11] sm:$0xff] %v2840
    %2905 = vst [vmem:[#allocation11 + $0x8] sm:$0xff] %v2841
    %2906 = vst [vmem:[#allocation11 + $0x10] sm:$0xff] %v2842
    %2907 = vst [vmem:[#allocation11 + $0x18] sm:$0xff] %v2843
    %2908 = vst [vmem:[#allocation11 + $0x20] sm:$0xff] %v2844
    %2909 = vst [vmem:[#allocation11 + $0x28] sm:$0xff] %v2845
    %2910 = vst [vmem:[#allocation11 + $0x30] sm:$0xff] %v2846
    %2911 = vst [vmem:[#allocation11 + $0x38] sm:$0xff] %v2847
    %2912 = vst [vmem:[#allocation11 + $0x40] sm:$0xff] %v2848
    %2913 = vst [vmem:[#allocation11 + $0x48] sm:$0xff] %v2849
    %2914 = vst [vmem:[#allocation11 + $0x50] sm:$0xff] %v2850
    %2915 = vst [vmem:[#allocation11 + $0x58] sm:$0xff] %v2851
    %2916 = vst [vmem:[#allocation11 + $0x60] sm:$0xff] %v2852
    %2917 = vst [vmem:[#allocation11 + $0x68] sm:$0xff] %v2853
    %2918 = vst [vmem:[#allocation11 + $0x70] sm:$0xff] %v2854
    %2919 = vst [vmem:[#allocation11 + $0x78] sm:$0xff] %v2855
    %2920 = vst [vmem:[#allocation11 + $0x80] sm:$0xff] %v2856
    %2921 = vst [vmem:[#allocation11 + $0x88] sm:$0xff] %v2857
    %2922 = vst [vmem:[#allocation11 + $0x90] sm:$0xff] %v2858
    %2923 = vst [vmem:[#allocation11 + $0x98] sm:$0xff] %v2859
    %2924 = vst [vmem:[#allocation11 + $0xa0] sm:$0xff] %v2860
    %2925 = vst [vmem:[#allocation11 + $0xa8] sm:$0xff] %v2861
    %2926 = vst [vmem:[#allocation11 + $0xb0] sm:$0xff] %v2862
    %2927 = vst [vmem:[#allocation11 + $0xb8] sm:$0xff] %v2863
    %2928 = vst [vmem:[#allocation11 + $0xc0] sm:$0xff] %v2864
    %2929 = vst [vmem:[#allocation11 + $0xc8] sm:$0xff] %v2865
    %2930 = vst [vmem:[#allocation11 + $0xd0] sm:$0xff] %v2866
    %2931 = vst [vmem:[#allocation11 + $0xd8] sm:$0xff] %v2867
    %2932 = vst [vmem:[#allocation11 + $0xe0] sm:$0xff] %v2868
    %2933 = vst [vmem:[#allocation11 + $0xe8] sm:$0xff] %v2869
    %2934 = vst [vmem:[#allocation11 + $0xf0] sm:$0xff] %v2870
    %2935 = vst [vmem:[#allocation11 + $0xf8] sm:$0xff] %v2871
    %2936 = vst [vmem:[#allocation11 + $0x100] sm:$0xff] %v2872
    %2937 = vst [vmem:[#allocation11 + $0x108] sm:$0xff] %v2873
    %2938 = vst [vmem:[#allocation11 + $0x110] sm:$0xff] %v2874
    %2939 = vst [vmem:[#allocation11 + $0x118] sm:$0xff] %v2875
    %2940 = vst [vmem:[#allocation11 + $0x120] sm:$0xff] %v2876
    %2941 = vst [vmem:[#allocation11 + $0x128] sm:$0xff] %v2877
    %2942 = vst [vmem:[#allocation11 + $0x130] sm:$0xff] %v2878
    %2943 = vst [vmem:[#allocation11 + $0x138] sm:$0xff] %v2879
    %2944 = vst [vmem:[#allocation11 + $0x140] sm:$0xff] %v2880
    %2945 = vst [vmem:[#allocation11 + $0x148] sm:$0xff] %v2881
    %2946 = vst [vmem:[#allocation11 + $0x150] sm:$0xff] %v2882
    %2947 = vst [vmem:[#allocation11 + $0x158] sm:$0xff] %v2883
    %2948 = vst [vmem:[#allocation11 + $0x160] sm:$0xff] %v2884
    %2949 = vst [vmem:[#allocation11 + $0x168] sm:$0xff] %v2885
    %2950 = vst [vmem:[#allocation11 + $0x170] sm:$0xff] %v2886
    %2951 = vst [vmem:[#allocation11 + $0x178] sm:$0xff] %v2887
    %2952 = vst [vmem:[#allocation11 + $0x180] sm:$0xff] %v2888
    %2953 = vst [vmem:[#allocation11 + $0x188] sm:$0xff] %v2889
    %2954 = vst [vmem:[#allocation11 + $0x190] sm:$0xff] %v2890
    %2955 = vst [vmem:[#allocation11 + $0x198] sm:$0xff] %v2891
    %2956 = vst [vmem:[#allocation11 + $0x1a0] sm:$0xff] %v2892
    %2957 = vst [vmem:[#allocation11 + $0x1a8] sm:$0xff] %v2893
    %2958 = vst [vmem:[#allocation11 + $0x1b0] sm:$0xff] %v2894
    %2959 = vst [vmem:[#allocation11 + $0x1b8] sm:$0xff] %v2895
    %2960 = vst [vmem:[#allocation11 + $0x1c0] sm:$0xff] %v2896
    %2961 = vst [vmem:[#allocation11 + $0x1c8] sm:$0xff] %v2897
    %2962 = vst [vmem:[#allocation11 + $0x1d0] sm:$0xff] %v2898
    %2963 = vst [vmem:[#allocation11 + $0x1d8] sm:$0xff] %v2899
    %2964 = vst [vmem:[#allocation11 + $0x1e0] sm:$0xff] %v2900
    %2965 = vst [vmem:[#allocation11 + $0x1e8] sm:$0xff] %v2901
    %2966 = vst [vmem:[#allocation11 + $0x1f0] sm:$0xff] %v2902
    %2967 = vst [vmem:[#allocation11 + $0x1f8] sm:$0xff] %v2903
    // Predicated region
    $region54: #{tpu_custom_call.1} parent=1 // pred_check
      _
    $region55: #{tpu_custom_call.1} parent=1 // pred_check_branch
      %2969 = sbr.rel (0) target = $region57
    $region56: #{tpu_custom_call.1} parent=1 // pred_region
      %s2971 = ssub.s32 8192, 8192
      %2972 = vsyncadd [#allocation4], %s2971
      %s2973 = sshll.u32 [#allocation11], 4
      %s2974 = int_to_ptr.vmem [resolvable:$true] %s2973
      %2979 = dma.vmem_to_hbm [thread:$0]  %s2974, 8192, %s8, [#allocation4], 1024, 1024, 64
    $region57: #{tpu_custom_call.1} parent=1 // pred_fallthru
      _
    // Predicated region
    $region58: #{tpu_custom_call.1} parent=1 // pred_check
      _
    $region59: #{tpu_custom_call.1} parent=1 // pred_check_branch
      %2981 = sbr.rel (0) target = $region61
    $region60: #{tpu_custom_call.1} parent=1 // pred_region
      %2982 = dma.done [#allocation4], 8192
    $region61: #{tpu_custom_call.1} parent=1 // pred_fallthru
      _
    %2983 = vsyncpa [#allocation3], 1
    %2984 = vsyncpa [#allocation6], 1
    %2985 = vsyncpa [#allocation9], 1
    %2986 = vsyncpa [#allocation4], 1

</llo_original>
